<compile_context>
chip_gen: v7x
topology: tpu7x:2x2x1
jax: 0.10.0
libtpu: 0.0.40
codegen_flags: <defaults>
</compile_context>

<pallas_src>
import functools

import jax
import jax.numpy as jnp
from jax.experimental import pallas as pl
from jax.experimental.pallas import tpu as pltpu

EPS = 1e-5
LANE = 128


# ------------------------------ small utilities -------------------------------
def _round_up(x, m):
    return (x + m - 1) // m * m


def _pad2(a, rows, cols):
    return jnp.pad(a, ((0, rows - a.shape[0]), (0, cols - a.shape[1])))


def _tpu_mem_config():
    """Generation-aware compiler VMEM limit and working-set budget."""
    try:
        cap = pltpu.get_tpu_info().vmem_capacity_bytes
    except Exception:
        cap = 128 * 1024 * 1024
    # v5e/v6e (128 MiB): limit 96 MiB, budget 48 MiB.  v7x (64 MiB): 48 / 24 MiB.
    vmem_limit = min(3 * cap // 4, 96 * 1024 * 1024)
    budget = vmem_limit // 2
    return vmem_limit, budget


def _choose_tile_k(k):
    """Pick a K tile (multiple of 128) and padded K such that tile_k | kp."""
    k128 = _round_up(k, 128)
    if k128 <= 768:
        return k128, k128            # single K step
    best = None
    for tk in (512, 384, 256, 128):
        kp = _round_up(k, tk)
        if best is None or kp < best[1] or (kp == best[1] and tk > best[0]):
            best = (tk, kp)
    return best


def _pick_tile_m(m, tile_k, cp, budget):
    def need(t):
        return (2 * t * tile_k * 2       # bf16 patch tile, double-buffered
                + 2 * tile_k * cp * 2    # bf16 weight tile, double-buffered
                + 2 * t * cp * 2         # bf16 output tile, double-buffered
                + t * cp * 4             # f32 accumulator scratch
                + 4 * 8 * cp * 4)        # BN partial-sum tiles
    tile = 2048
    while tile > 128 and need(tile) > budget:
        tile //= 2
    # Don't over-pad tiny problems.
    tile = min(tile, max(128, _round_up(m, 128)))
    # Keep the parallel M axis >= 2 tiles wide (v7x has two TensorCores).
    while tile >= 256 and _round_up(m, tile) // tile < 2:
        tile //= 2
    return tile


def _pick_ew_tile(mp, base_tile, cp, budget):
    """Larger M tile for the memory-bound element-wise passes."""
    def need(t):
        return 2 * t * cp * (2 + 2 + 4) + 8 * cp * 4
    t = base_tile
    while (t * 2 <= mp and mp % (t * 2) == 0 and t * 2 <= 8192
           and need(t * 2) <= budget):
        t *= 2
    return t


# --------------------------------- kernels -------------------------------------
def _gemm_stats_kernel(p_ref, w_ref, y_ref, sum_ref, sq_ref, acc_ref):
    # Pass 1: y = patches @ W (bf16 in, f32 accumulate over K tiles) plus
    # per-M-tile BN channel sum / sum-of-squares taken from the f32 accumulator.
    k = pl.program_id(1)

    @pl.when(k == 0)
    def _():
        acc_ref[...] = jnp.zeros_like(acc_ref)

    acc_ref[...] += jnp.dot(p_ref[...], w_ref[...],
                            preferred_element_type=jnp.float32)

    @pl.when(k == pl.num_programs(1) - 1)
    def _():
        acc = acc_ref[...]
        y_ref[...] = acc.astype(y_ref.dtype)                 # bf16 store (half traffic)
        s = jnp.sum(acc, axis=0, keepdims=True)              # (1, Cp)
        q = jnp.sum(acc * acc, axis=0, keepdims=True)        # (1, Cp)
        sum_ref[...] = jnp.broadcast_to(s, sum_ref.shape)
        sq_ref[...] = jnp.broadcast_to(q, sq_ref.shape)


def _bn_relu_kernel(y_ref, sc_ref, of_ref, o_ref):
    y = y_ref[...].astype(jnp.float32) * sc_ref[...] + of_ref[...]
    o_ref[...] = jnp.maximum(y, 0.0).astype(o_ref.dtype)


def _bn_add_relu_kernel(y_ref, sc_ref, of_ref, r_ref, rsc_ref, rof_ref, o_ref):
    # o = relu((y*sc+of) + (r*rsc+rof))  -- downsample-BN residual
    y = y_ref[...].astype(jnp.float32) * sc_ref[...] + of_ref[...]
    r = r_ref[...].astype(jnp.float32) * rsc_ref[...] + rof_ref[...]
    o_ref[...] = jnp.maximum(y + r, 0.0).astype(o_ref.dtype)


def _bn_addid_relu_kernel(y_ref, sc_ref, of_ref, r_ref, o_ref):
    # o = relu((y*sc+of) + r)  -- identity residual (no scale/offset math)
    y = y_ref[...].astype(jnp.float32) * sc_ref[...] + of_ref[...]
    o_ref[...] = jnp.maximum(y + r_ref[...].astype(jnp.float32), 0.0).astype(o_ref.dtype)


# ----------------------------- pallas_call builders -----------------------------
def _conv_gemm_stats(patches, weight, tile_m, tile_k, vmem_limit):
    """patches (Mp, Kp) bf16 @ weight (Kp, Cp) bf16 -> y (Mp, Cp) bf16 + stats."""
    mp, kp = patches.shape
    cp = weight.shape[1]
    n_m, n_k = mp // tile_m, kp // tile_k
    return pl.pallas_call(
        _gemm_stats_kernel,
        grid_spec=pltpu.PrefetchScalarGridSpec(
            num_scalar_prefetch=0,
            grid=(n_m, n_k),
            in_specs=[
                pl.BlockSpec((tile_m, tile_k), lambda i, k: (i, k)),
                pl.BlockSpec((tile_k, cp), lambda i, k: (k, 0)),
            ],
            out_specs=(
                pl.BlockSpec((tile_m, cp), lambda i, k: (i, 0)),
                pl.BlockSpec((8, cp), lambda i, k: (i, 0)),
                pl.BlockSpec((8, cp), lambda i, k: (i, 0)),
            ),
            scratch_shapes=[pltpu.VMEM((tile_m, cp), jnp.float32)],
        ),
        out_shape=(
            jax.ShapeDtypeStruct((mp, cp), jnp.bfloat16),
            jax.ShapeDtypeStruct((8 * n_m, cp), jnp.float32),
            jax.ShapeDtypeStruct((8 * n_m, cp), jnp.float32),
        ),
        compiler_params=pltpu.CompilerParams(
            dimension_semantics=("parallel", "arbitrary"),
            vmem_limit_bytes=vmem_limit,
        ),
        cost_estimate=pl.CostEstimate(
            flops=2 * mp * kp * cp,
            transcendentals=0,
            bytes_accessed=patches.size * 2 + weight.size * 2 + mp * cp * 2,
        ),
    )(patches, weight)


def _bn_relu(y, scale, offset, tile_m, vmem_limit, out_dtype):
    mp, cp = y.shape
    return pl.pallas_call(
        _bn_relu_kernel,
        grid_spec=pltpu.PrefetchScalarGridSpec(
            num_scalar_prefetch=0,
            grid=(mp // tile_m,),
            in_specs=[
                pl.BlockSpec((tile_m, cp), lambda i: (i, 0)),
                pl.BlockSpec((1, cp), lambda i: (0, 0)),
                pl.BlockSpec((1, cp), lambda i: (0, 0)),
            ],
            out_specs=pl.BlockSpec((tile_m, cp), lambda i: (i, 0)),
        ),
        out_shape=jax.ShapeDtypeStruct((mp, cp), out_dtype),
        compiler_params=pltpu.CompilerParams(
            dimension_semantics=("parallel",),
            vmem_limit_bytes=vmem_limit,
        ),
    )(y, scale, offset)


def _bn_add_relu(y, scale, offset, res, rscale, roffset, tile_m, vmem_limit, out_dtype):
    mp, cp = y.shape
    return pl.pallas_call(
        _bn_add_relu_kernel,
        grid_spec=pltpu.PrefetchScalarGridSpec(
            num_scalar_prefetch=0,
            grid=(mp // tile_m,),
            in_specs=[
                pl.BlockSpec((tile_m, cp), lambda i: (i, 0)),
                pl.BlockSpec((1, cp), lambda i: (0, 0)),
                pl.BlockSpec((1, cp), lambda i: (0, 0)),
                pl.BlockSpec((tile_m, cp), lambda i: (i, 0)),
                pl.BlockSpec((1, cp), lambda i: (0, 0)),
                pl.BlockSpec((1, cp), lambda i: (0, 0)),
            ],
            out_specs=pl.BlockSpec((tile_m, cp), lambda i: (i, 0)),
        ),
        out_shape=jax.ShapeDtypeStruct((mp, cp), out_dtype),
        compiler_params=pltpu.CompilerParams(
            dimension_semantics=("parallel",),
            vmem_limit_bytes=vmem_limit,
        ),
    )(y, scale, offset, res, rscale, roffset)


def _bn_addid_relu(y, scale, offset, res, tile_m, vmem_limit, out_dtype):
    mp, cp = y.shape
    return pl.pallas_call(
        _bn_addid_relu_kernel,
        grid_spec=pltpu.PrefetchScalarGridSpec(
            num_scalar_prefetch=0,
            grid=(mp // tile_m,),
            in_specs=[
                pl.BlockSpec((tile_m, cp), lambda i: (i, 0)),
                pl.BlockSpec((1, cp), lambda i: (0, 0)),
                pl.BlockSpec((1, cp), lambda i: (0, 0)),
                pl.BlockSpec((tile_m, cp), lambda i: (i, 0)),
            ],
            out_specs=pl.BlockSpec((tile_m, cp), lambda i: (i, 0)),
        ),
        out_shape=jax.ShapeDtypeStruct((mp, cp), out_dtype),
        compiler_params=pltpu.CompilerParams(
            dimension_semantics=("parallel",),
            vmem_limit_bytes=vmem_limit,
        ),
    )(y, scale, offset, res)


# ------------------------------ glue (plain JAX) --------------------------------
def _im2col(x_nhwc, k, stride, pad):
    # Pure data rearrangement (no math): (N,H,W,C) -> (N*Ho*Wo, k*k*C).
    # Input is bf16, so the 9x patch matrix is half the previous HBM footprint.
    N, H, W, C = x_nhwc.shape
    Ho = (H + 2 * pad - k) // stride + 1
    Wo = (W + 2 * pad - k) // stride + 1
    xp = jnp.pad(x_nhwc, ((0, 0), (pad, pad), (pad, pad), (0, 0)))
    cols = []
    for kh in range(k):
        for kw in range(k):
            cols.append(xp[:, kh:kh + stride * (Ho - 1) + 1:stride,
                               kw:kw + stride * (Wo - 1) + 1:stride, :])
    p = jnp.stack(cols, axis=3)  # (N, Ho, Wo, k*k, C)
    return p.reshape(N * Ho * Wo, k * k * C), Ho, Wo


def _finalize_bn(sum_rows, sq_rows, m_true, gamma, beta, cp):
    # Fold per-tile partial sums into a global training-mode BN scale/offset.
    # NOTE: var = E[x^2] - E[x]^2 in f32; fine for conv outputs whose mean is
    # comparable to their std.  Padded M rows / padded channels contribute
    # exactly zero to the partial sums (zero-padded patches / weights).
    s = jnp.sum(sum_rows.reshape(-1, 8, cp)[:, 0, :], axis=0)
    q = jnp.sum(sq_rows.reshape(-1, 8, cp)[:, 0, :], axis=0)
    mean = s / m_true
    var = jnp.maximum(q / m_true - mean * mean, 0.0)
    g = jnp.pad(gamma, (0, cp - gamma.shape[0]))
    b = jnp.pad(beta, (0, cp - beta.shape[0]))
    scale = g * jax.lax.rsqrt(var + EPS)
    offset = b - mean * scale
    return scale.reshape(1, cp), offset.reshape(1, cp)


@functools.partial(jax.jit, static_argnames=("stride",))
def resnet_block_forward(x_nchw, params, stride):
    vmem_limit, budget = _tpu_mem_config()

    x = jnp.transpose(x_nchw, (0, 2, 3, 1)).astype(jnp.bfloat16)  # NCHW -> NHWC, bf16
    n, h, w, cin = x.shape
    cout = params["w1"].shape[-1]

    ho = (h + 2 - 3) // stride + 1
    wo = (w + 2 - 3) // stride + 1
    m = n * ho * wo

    cp = _round_up(cout, LANE)
    k1, k2, kd = 9 * cin, 9 * cout, cin
    tk1, k1p = _choose_tile_k(k1)
    tk2, k2p = _choose_tile_k(k2)
    tkd, kdp = _choose_tile_k(kd)

    tile_m = _pick_tile_m(m, max(tk1, tk2, tkd), cp, budget)
    mp = _round_up(m, tile_m)
    ew_tile = _pick_ew_tile(mp, tile_m, cp, budget)

    # ---- conv1 (3x3, stride, pad 1) + BN1 + ReLU ----
    p1, _, _ = _im2col(x, 3, stride, 1)                                    # (m, k1) bf16
    p1 = _pad2(p1, mp, k1p)
    w1 = _pad2(params["w1"].reshape(k1, cout).astype(jnp.bfloat16), k1p, cp)
    y1_raw, s1s, s1q = _conv_gemm_stats(p1, w1, tile_m, tk1, vmem_limit)
    sc1, of1 = _finalize_bn(s1s, s1q, m, params["g1"], params["b1"], cp)
    y1p = _bn_relu(y1_raw, sc1, of1, ew_tile, vmem_limit, jnp.bfloat16)    # (mp, cp) bf16
    y1 = y1p[:m, :cout].reshape(n, ho, wo, cout)

    # ---- conv2 (3x3, stride 1, pad 1) + BN2 ----
    # TODO(synk): implicit im2col (halo DMA + 9 shifted matmuls) would avoid
    # materializing this 9x bf16 patch matrix in HBM.
    p2, _, _ = _im2col(y1, 3, 1, 1)                                        # (m, k2) bf16
    p2 = _pad2(p2, mp, k2p)
    w2 = _pad2(params["w2"].reshape(k2, cout).astype(jnp.bfloat16), k2p, cp)
    y2_raw, s2s, s2q = _conv_gemm_stats(p2, w2, tile_m, tk2, vmem_limit)
    sc2, of2 = _finalize_bn(s2s, s2q, m, params["g2"], params["b2"], cp)

    # ---- residual branch + add + ReLU ----
    if (stride != 1) or (cin != cout):
        # 1x1 stride-s conv = strided spatial subsample, then GEMM + BN.
        # TODO(synk): fuse this GEMM into the conv2 call (shared M grid).
        xd = x[:, ::stride, ::stride, :][:, :ho, :wo, :].reshape(m, cin)
        xd = _pad2(xd, mp, kdp)
        wd = _pad2(params["wd"].reshape(kd, cout).astype(jnp.bfloat16), kdp, cp)
        r_raw, sds, sdq = _conv_gemm_stats(xd, wd, tile_m, tkd, vmem_limit)
        scd, ofd = _finalize_bn(sds, sdq, m, params["gd"], params["bd"], cp)
        out = _bn_add_relu(y2_raw, sc2, of2, r_raw, scd, ofd,
                           ew_tile, vmem_limit, jnp.float32)
    else:
        res = _pad2(x.reshape(m, cin), mp, cp)                             # identity, bf16
        out = _bn_addid_relu(y2_raw, sc2, of2, res, ew_tile, vmem_limit, jnp.float32)

    out = out[:m, :cout].reshape(n, ho, wo, cout)
    return jnp.transpose(out, (0, 3, 1, 2)).astype(jnp.float32)  # back to NCHW


# ----------------------------- pure-JAX reference --------------------------------
def _bn_ref(y, g, b):
    mean = jnp.mean(y, axis=(0, 1, 2), keepdims=True)
    var = jnp.mean((y - mean) ** 2, axis=(0, 1, 2), keepdims=True)
    return (y - mean) * jax.lax.rsqrt(var + EPS) * g + b


def reference_forward(x_nchw, params, stride):
    x = jnp.transpose(x_nchw, (0, 2, 3, 1)).astype(jnp.float32)
    cin, cout = x.shape[-1], params["w1"].shape[-1]
    conv = lambda a, w, s, pad: jax.lax.conv_general_dilated(
        a, w, (s, s), [(pad, pad), (pad, pad)],
        dimension_numbers=("NHWC", "HWIO", "NHWC"))
    y = jax.nn.relu(_bn_ref(conv(x, params["w1"], stride, 1), params["g1"], params["b1"]))
    y = _bn_ref(conv(y, params["w2"], 1, 1), params["g2"], params["b2"])
    if (stride != 1) or (cin != cout):
        r = _bn_ref(conv(x, params["wd"], stride, 0), params["gd"], params["bd"])
    else:
        r = x
    return jnp.transpose(jax.nn.relu(y + r), (0, 3, 1, 2))


# --------------------------------- parameters ------------------------------------
def init_params(key, cin, cout, stride):
    k1, k2, k3, k4, k5, k6, k7 = jax.random.split(key, 7)
    p = {
        "w1": jax.random.normal(k1, (3, 3, cin, cout), jnp.float32) / jnp.sqrt(9.0 * cin),
        "g1": 1.0 + 0.1 * jax.random.normal(k2, (cout,), jnp.float32),
        "b1": 0.1 * jax.random.normal(k3, (cout,), jnp.float32),
        "w2": jax.random.normal(k4, (3, 3, cout, cout), jnp.float32) / jnp.sqrt(9.0 * cout),
        "g2": 1.0 + 0.1 * jax.random.normal(k5, (cout,), jnp.float32),
        "b2": 0.1 * jax.random.normal(k6, (cout,), jnp.float32),
    }
    if stride != 1 or cin != cout:
        kd1, kd2, kd3 = jax.random.split(k7, 3)
        p["wd"] = jax.random.normal(kd1, (1, 1, cin, cout), jnp.float32) / jnp.sqrt(1.0 * cin)
        p["gd"] = 1.0 + 0.1 * jax.random.normal(kd2, (cout,), jnp.float32)
        p["bd"] = 0.1 * jax.random.normal(kd3, (cout,), jnp.float32)
    return p


if __name__ == "__main__":
    key = jax.random.PRNGKey(0)
    kx, kp, kx2, kp2 = jax.random.split(key, 4)

    # Config A: downsample branch (stride=2, channel change).
    N, Cin, H, W, Cout, stride = 2, 4, 16, 16, 8, 2
    x = jax.random.normal(kx, (N, Cin, H, W), jnp.float32)  # NCHW like PyTorch
    params = init_params(kp, Cin, Cout, stride)
    out = jax.block_until_ready(resnet_block_forward(x, params, stride))
    ref = jax.block_until_ready(reference_forward(x, params, stride))
    assert out.shape == (N, Cout, (H - 1) // stride + 1, (W - 1) // stride + 1), out.shape
    # bf16 GEMM inputs / intermediates (f32 accumulate) -> looser tolerance than f32.
    assert bool(jnp.allclose(out, ref, atol=5e-2, rtol=5e-2)), "downsample-branch mismatch"

    # Config B: identity branch (stride=1, same channels).
    N2, C2, H2, W2 = 2, 8, 16, 16
    x2 = jax.random.normal(kx2, (N2, C2, H2, W2), jnp.float32)
    params2 = init_params(kp2, C2, C2, 1)
    out2 = jax.block_until_ready(resnet_block_forward(x2, params2, 1))
    ref2 = jax.block_until_ready(reference_forward(x2, params2, 1))
    assert out2.shape == (N2, C2, H2, W2), out2.shape
    assert bool(jnp.allclose(out2, ref2, atol=5e-2, rtol=5e-2)), "identity-branch mismatch"

    # TODO(synk): BatchNorm running_mean/running_var buffer updates (training
    # side-effects) are not materialized; only the normalization math is.
    print("KERNEL_OK")
</pallas_src>

<mosaic_0001>
module attributes {stable_mosaic.version = 11 : i64} {
  func.func @_gemm_stats_kernel(%arg0: i32, %arg1: i32, %arg2: memref<128x128xbf16, #tpu.memory_space<vmem>>, %arg3: memref<128x128xbf16, #tpu.memory_space<vmem>>, %arg4: memref<128x128xbf16, #tpu.memory_space<vmem>>, %arg5: memref<8x128xf32, #tpu.memory_space<vmem>>, %arg6: memref<8x128xf32, #tpu.memory_space<vmem>>, %arg7: memref<128x128xf32, #tpu.memory_space<vmem>>) attributes {dimension_semantics = [#tpu.dimension_semantics<parallel>, #tpu.dimension_semantics<arbitrary>], iteration_bounds = array<i64: 1, 1>, scalar_prefetch = 0 : i64, scratch_operands = 1 : i64, tpu.core_type = #tpu.core_type<tc>, window_params = [{transform_indices = @transform_0, window_bounds = array<i64: 128, 128>}, {transform_indices = @transform_1, window_bounds = array<i64: 128, 128>}, {transform_indices = @transform_2, window_bounds = array<i64: 128, 128>}, {transform_indices = @transform_3, window_bounds = array<i64: 8, 128>}, {transform_indices = @transform_4, window_bounds = array<i64: 8, 128>}]} {
    %c0_i32 = arith.constant 0 : i32
    %0 = arith.cmpi eq, %arg1, %c0_i32 : i32
    %1 = arith.extui %0 : i1 to i32
    %c0_i32_0 = arith.constant 0 : i32
    %2 = arith.cmpi ne, %1, %c0_i32_0 : i32
    scf.if %2 {
      %cst_10 = arith.constant 0.000000e+00 : f32
      %12 = vector.broadcast %cst_10 : f32 to vector<128x128xf32>
      %c0_11 = arith.constant 0 : index
      %c0_12 = arith.constant 0 : index
      %13 = vector.load %arg7[%c0_11, %c0_12] : memref<128x128xf32, #tpu.memory_space<vmem>>, vector<128x128xf32>
      tpu.vector_store %arg7[%c0_11, %c0_12], %12 {strides = array<i32>} : memref<128x128xf32, #tpu.memory_space<vmem>>, vector<128x128xf32>,
    } else {
    }
    %c0 = arith.constant 0 : index
    %c0_1 = arith.constant 0 : index
    %3 = vector.load %arg7[%c0, %c0_1] : memref<128x128xf32, #tpu.memory_space<vmem>>, vector<128x128xf32>
    %c0_2 = arith.constant 0 : index
    %c0_3 = arith.constant 0 : index
    %4 = vector.load %arg2[%c0_2, %c0_3] : memref<128x128xbf16, #tpu.memory_space<vmem>>, vector<128x128xbf16>
    %c0_4 = arith.constant 0 : index
    %c0_5 = arith.constant 0 : index
    %5 = vector.load %arg3[%c0_4, %c0_5] : memref<128x128xbf16, #tpu.memory_space<vmem>>, vector<128x128xbf16>
    %cst = arith.constant dense<0.000000e+00> : vector<128x128xf32>
    %6 = tpu.matmul %4, %5, %cst {dimension_numbers = #tpu.dot_dimension_numbers<[1], [0], [0], [1], [0, 0, 1, 1], [], []>} : vector<128x128xbf16>, vector<128x128xbf16>, vector<128x128xf32> -> vector<128x128xf32>
    %7 = arith.addf %3, %6 : vector<128x128xf32>
    %c0_6 = arith.constant 0 : index
    %c0_7 = arith.constant 0 : index
    %8 = vector.load %arg7[%c0_6, %c0_7] : memref<128x128xf32, #tpu.memory_space<vmem>>, vector<128x128xf32>
    tpu.vector_store %arg7[%c0_6, %c0_7], %7 {strides = array<i32>} : memref<128x128xf32, #tpu.memory_space<vmem>>, vector<128x128xf32>,
    %c0_i32_8 = arith.constant 0 : i32
    %9 = arith.cmpi eq, %arg1, %c0_i32_8 : i32
    %10 = arith.extui %9 : i1 to i32
    %c0_i32_9 = arith.constant 0 : i32
    %11 = arith.cmpi ne, %10, %c0_i32_9 : i32
    scf.if %11 {
      %c0_10 = arith.constant 0 : index
      %c0_11 = arith.constant 0 : index
      %12 = vector.load %arg7[%c0_10, %c0_11] : memref<128x128xf32, #tpu.memory_space<vmem>>, vector<128x128xf32>
      %13 = arith.truncf %12 : vector<128x128xf32> to vector<128x128xbf16>
      %c0_12 = arith.constant 0 : index
      %c0_13 = arith.constant 0 : index
      %14 = vector.load %arg4[%c0_12, %c0_13] : memref<128x128xbf16, #tpu.memory_space<vmem>>, vector<128x128xbf16>
      tpu.vector_store %arg4[%c0_12, %c0_13], %13 {strides = array<i32>} : memref<128x128xbf16, #tpu.memory_space<vmem>>, vector<128x128xbf16>,
      %cst_14 = arith.constant dense<0.000000e+00> : vector<128xf32>
      %15 = vector.multi_reduction <add>, %12, %cst_14 [0] : vector<128x128xf32> to vector<128xf32>
      %16 = vector.shape_cast %15 : vector<128xf32> to vector<1x128xf32>
      %17 = arith.mulf %12, %12 : vector<128x128xf32>
      %cst_15 = arith.constant dense<0.000000e+00> : vector<128xf32>
      %18 = vector.multi_reduction <add>, %17, %cst_15 [0] : vector<128x128xf32> to vector<128xf32>
      %19 = vector.shape_cast %18 : vector<128xf32> to vector<1x128xf32>
      %20 = vector.shape_cast %16 : vector<1x128xf32> to vector<1x128xf32>
      %21 = vector.broadcast %20 : vector<1x128xf32> to vector<8x128xf32>
      %c0_16 = arith.constant 0 : index
      %c0_17 = arith.constant 0 : index
      %22 = vector.load %arg5[%c0_16, %c0_17] : memref<8x128xf32, #tpu.memory_space<vmem>>, vector<8x128xf32>
      tpu.vector_store %arg5[%c0_16, %c0_17], %21 {strides = array<i32>} : memref<8x128xf32, #tpu.memory_space<vmem>>, vector<8x128xf32>,
      %23 = vector.shape_cast %19 : vector<1x128xf32> to vector<1x128xf32>
      %24 = vector.broadcast %23 : vector<1x128xf32> to vector<8x128xf32>
      %c0_18 = arith.constant 0 : index
      %c0_19 = arith.constant 0 : index
      %25 = vector.load %arg6[%c0_18, %c0_19] : memref<8x128xf32, #tpu.memory_space<vmem>>, vector<8x128xf32>
      tpu.vector_store %arg6[%c0_18, %c0_19], %24 {strides = array<i32>} : memref<8x128xf32, #tpu.memory_space<vmem>>, vector<8x128xf32>,
    } else {
    }
    return
  }
  func.func @transform_0(%arg0: i32, %arg1: i32) -> (i32, i32) {
    %c0_i32 = arith.constant 0 : i32
    return %arg0, %arg1 : i32, i32
  }
  func.func @transform_1(%arg0: i32, %arg1: i32) -> (i32, i32) {
    %c0_i32 = arith.constant 0 : i32
    %c0_i32_0 = arith.constant 0 : i32
    return %arg1, %c0_i32 : i32, i32
  }
  func.func @transform_2(%arg0: i32, %arg1: i32) -> (i32, i32) {
    %c0_i32 = arith.constant 0 : i32
    %c0_i32_0 = arith.constant 0 : i32
    return %arg0, %c0_i32 : i32, i32
  }
  func.func @transform_3(%arg0: i32, %arg1: i32) -> (i32, i32) {
    %c0_i32 = arith.constant 0 : i32
    %c0_i32_0 = arith.constant 0 : i32
    return %arg0, %c0_i32 : i32, i32
  }
  func.func @transform_4(%arg0: i32, %arg1: i32) -> (i32, i32) {
    %c0_i32 = arith.constant 0 : i32
    %c0_i32_0 = arith.constant 0 : i32
    return %arg0, %c0_i32 : i32, i32
  }
}

module attributes {stable_mosaic.version = 11 : i64} {
  func.func @_bn_relu_kernel(%arg0: i32, %arg1: memref<128x128xbf16, #tpu.memory_space<vmem>>, %arg2: memref<1x128xf32, #tpu.memory_space<vmem>>, %arg3: memref<1x128xf32, #tpu.memory_space<vmem>>, %arg4: memref<128x128xbf16, #tpu.memory_space<vmem>>) attributes {dimension_semantics = [#tpu.dimension_semantics<parallel>], iteration_bounds = array<i64: 1>, scalar_prefetch = 0 : i64, scratch_operands = 0 : i64, tpu.core_type = #tpu.core_type<tc>, window_params = [{transform_indices = @transform_0, window_bounds = array<i64: 128, 128>}, {pipeline_mode = #tpu.pipeline_mode<synchronous>, transform_indices = @transform_1, window_bounds = array<i64: 1, 128>}, {pipeline_mode = #tpu.pipeline_mode<synchronous>, transform_indices = @transform_2, window_bounds = array<i64: 1, 128>}, {transform_indices = @transform_3, window_bounds = array<i64: 128, 128>}]} {
    %c0 = arith.constant 0 : index
    %c0_0 = arith.constant 0 : index
    %0 = vector.load %arg1[%c0, %c0_0] : memref<128x128xbf16, #tpu.memory_space<vmem>>, vector<128x128xbf16>
    %1 = arith.extf %0 : vector<128x128xbf16> to vector<128x128xf32>
    %c0_1 = arith.constant 0 : index
    %c0_2 = arith.constant 0 : index
    %2 = vector.load %arg2[%c0_1, %c0_2] : memref<1x128xf32, #tpu.memory_space<vmem>>, vector<1x128xf32>
    %3 = vector.broadcast %2 : vector<1x128xf32> to vector<128x128xf32>
    %4 = arith.mulf %1, %3 : vector<128x128xf32>
    %c0_3 = arith.constant 0 : index
    %c0_4 = arith.constant 0 : index
    %5 = vector.load %arg3[%c0_3, %c0_4] : memref<1x128xf32, #tpu.memory_space<vmem>>, vector<1x128xf32>
    %6 = vector.broadcast %5 : vector<1x128xf32> to vector<128x128xf32>
    %7 = arith.addf %4, %6 : vector<128x128xf32>
    %cst = arith.constant 0.000000e+00 : f32
    %8 = vector.broadcast %cst : f32 to vector<128x128xf32>
    %9 = arith.maximumf %7, %8 : vector<128x128xf32>
    %10 = arith.truncf %9 : vector<128x128xf32> to vector<128x128xbf16>
    %c0_5 = arith.constant 0 : index
    %c0_6 = arith.constant 0 : index
    %11 = vector.load %arg4[%c0_5, %c0_6] : memref<128x128xbf16, #tpu.memory_space<vmem>>, vector<128x128xbf16>
    tpu.vector_store %arg4[%c0_5, %c0_6], %10 {strides = array<i32>} : memref<128x128xbf16, #tpu.memory_space<vmem>>, vector<128x128xbf16>,
    return
  }
  func.func @transform_0(%arg0: i32) -> (i32, i32) {
    %c0_i32 = arith.constant 0 : i32
    %c0_i32_0 = arith.constant 0 : i32
    return %arg0, %c0_i32 : i32, i32
  }
  func.func @transform_1(%arg0: i32) -> (i32, i32) {
    %c0_i32 = arith.constant 0 : i32
    %c0_i32_0 = arith.constant 0 : i32
    %c0_i32_1 = arith.constant 0 : i32
    return %c0_i32, %c0_i32_0 : i32, i32
  }
  func.func @transform_2(%arg0: i32) -> (i32, i32) {
    %c0_i32 = arith.constant 0 : i32
    %c0_i32_0 = arith.constant 0 : i32
    %c0_i32_1 = arith.constant 0 : i32
    return %c0_i32, %c0_i32_0 : i32, i32
  }
  func.func @transform_3(%arg0: i32) -> (i32, i32) {
    %c0_i32 = arith.constant 0 : i32
    %c0_i32_0 = arith.constant 0 : i32
    return %arg0, %c0_i32 : i32, i32
  }
}

module attributes {stable_mosaic.version = 11 : i64} {
  func.func @_bn_add_relu_kernel(%arg0: i32, %arg1: memref<128x128xbf16, #tpu.memory_space<vmem>>, %arg2: memref<1x128xf32, #tpu.memory_space<vmem>>, %arg3: memref<1x128xf32, #tpu.memory_space<vmem>>, %arg4: memref<128x128xbf16, #tpu.memory_space<vmem>>, %arg5: memref<1x128xf32, #tpu.memory_space<vmem>>, %arg6: memref<1x128xf32, #tpu.memory_space<vmem>>, %arg7: memref<128x128xf32, #tpu.memory_space<vmem>>) attributes {dimension_semantics = [#tpu.dimension_semantics<parallel>], iteration_bounds = array<i64: 1>, scalar_prefetch = 0 : i64, scratch_operands = 0 : i64, tpu.core_type = #tpu.core_type<tc>, window_params = [{transform_indices = @transform_0, window_bounds = array<i64: 128, 128>}, {pipeline_mode = #tpu.pipeline_mode<synchronous>, transform_indices = @transform_1, window_bounds = array<i64: 1, 128>}, {pipeline_mode = #tpu.pipeline_mode<synchronous>, transform_indices = @transform_2, window_bounds = array<i64: 1, 128>}, {transform_indices = @transform_3, window_bounds = array<i64: 128, 128>}, {pipeline_mode = #tpu.pipeline_mode<synchronous>, transform_indices = @transform_4, window_bounds = array<i64: 1, 128>}, {pipeline_mode = #tpu.pipeline_mode<synchronous>, transform_indices = @transform_5, window_bounds = array<i64: 1, 128>}, {transform_indices = @transform_6, window_bounds = array<i64: 128, 128>}]} {
    %c0 = arith.constant 0 : index
    %c0_0 = arith.constant 0 : index
    %0 = vector.load %arg1[%c0, %c0_0] : memref<128x128xbf16, #tpu.memory_space<vmem>>, vector<128x128xbf16>
    %1 = arith.extf %0 : vector<128x128xbf16> to vector<128x128xf32>
    %c0_1 = arith.constant 0 : index
    %c0_2 = arith.constant 0 : index
    %2 = vector.load %arg2[%c0_1, %c0_2] : memref<1x128xf32, #tpu.memory_space<vmem>>, vector<1x128xf32>
    %3 = vector.broadcast %2 : vector<1x128xf32> to vector<128x128xf32>
    %4 = arith.mulf %1, %3 : vector<128x128xf32>
    %c0_3 = arith.constant 0 : index
    %c0_4 = arith.constant 0 : index
    %5 = vector.load %arg3[%c0_3, %c0_4] : memref<1x128xf32, #tpu.memory_space<vmem>>, vector<1x128xf32>
    %6 = vector.broadcast %5 : vector<1x128xf32> to vector<128x128xf32>
    %7 = arith.addf %4, %6 : vector<128x128xf32>
    %c0_5 = arith.constant 0 : index
    %c0_6 = arith.constant 0 : index
    %8 = vector.load %arg4[%c0_5, %c0_6] : memref<128x128xbf16, #tpu.memory_space<vmem>>, vector<128x128xbf16>
    %9 = arith.extf %8 : vector<128x128xbf16> to vector<128x128xf32>
    %c0_7 = arith.constant 0 : index
    %c0_8 = arith.constant 0 : index
    %10 = vector.load %arg5[%c0_7, %c0_8] : memref<1x128xf32, #tpu.memory_space<vmem>>, vector<1x128xf32>
    %11 = vector.broadcast %10 : vector<1x128xf32> to vector<128x128xf32>
    %12 = arith.mulf %9, %11 : vector<128x128xf32>
    %c0_9 = arith.constant 0 : index
    %c0_10 = arith.constant 0 : index
    %13 = vector.load %arg6[%c0_9, %c0_10] : memref<1x128xf32, #tpu.memory_space<vmem>>, vector<1x128xf32>
    %14 = vector.broadcast %13 : vector<1x128xf32> to vector<128x128xf32>
    %15 = arith.addf %12, %14 : vector<128x128xf32>
    %16 = arith.addf %7, %15 : vector<128x128xf32>
    %cst = arith.constant 0.000000e+00 : f32
    %17 = vector.broadcast %cst : f32 to vector<128x128xf32>
    %18 = arith.maximumf %16, %17 : vector<128x128xf32>
    %c0_11 = arith.constant 0 : index
    %c0_12 = arith.constant 0 : index
    %19 = vector.load %arg7[%c0_11, %c0_12] : memref<128x128xf32, #tpu.memory_space<vmem>>, vector<128x128xf32>
    tpu.vector_store %arg7[%c0_11, %c0_12], %18 {strides = array<i32>} : memref<128x128xf32, #tpu.memory_space<vmem>>, vector<128x128xf32>,
    return
  }
  func.func @transform_0(%arg0: i32) -> (i32, i32) {
    %c0_i32 = arith.constant 0 : i32
    %c0_i32_0 = arith.constant 0 : i32
    return %arg0, %c0_i32 : i32, i32
  }
  func.func @transform_1(%arg0: i32) -> (i32, i32) {
    %c0_i32 = arith.constant 0 : i32
    %c0_i32_0 = arith.constant 0 : i32
    %c0_i32_1 = arith.constant 0 : i32
    return %c0_i32, %c0_i32_0 : i32, i32
  }
  func.func @transform_2(%arg0: i32) -> (i32, i32) {
    %c0_i32 = arith.constant 0 : i32
    %c0_i32_0 = arith.constant 0 : i32
    %c0_i32_1 = arith.constant 0 : i32
    return %c0_i32, %c0_i32_0 : i32, i32
  }
  func.func @transform_3(%arg0: i32) -> (i32, i32) {
    %c0_i32 = arith.constant 0 : i32
    %c0_i32_0 = arith.constant 0 : i32
    return %arg0, %c0_i32 : i32, i32
  }
  func.func @transform_4(%arg0: i32) -> (i32, i32) {
    %c0_i32 = arith.constant 0 : i32
    %c0_i32_0 = arith.constant 0 : i32
    %c0_i32_1 = arith.constant 0 : i32
    return %c0_i32, %c0_i32_0 : i32, i32
  }
  func.func @transform_5(%arg0: i32) -> (i32, i32) {
    %c0_i32 = arith.constant 0 : i32
    %c0_i32_0 = arith.constant 0 : i32
    %c0_i32_1 = arith.constant 0 : i32
    return %c0_i32, %c0_i32_0 : i32, i32
  }
  func.func @transform_6(%arg0: i32) -> (i32, i32) {
    %c0_i32 = arith.constant 0 : i32
    %c0_i32_0 = arith.constant 0 : i32
    return %arg0, %c0_i32 : i32, i32
  }
}

</mosaic_0001>

<llo_original>
// kernel: resnet_block_forward.6
$region0: #{resnet_block_forward.6}
  #allocation0 [shape = 'u32[]', space=smem, size = 0x4, offset = 0x4, fixed_abs, tag = 'smem constant byte address 0x4 - core index']
  #allocation1 [shape = 'u32[144,128]{1,0:T(1,128)}', space=vmem, size = 0x12000, scoped, tag = 'internal scratch']
  %s0 = inlined_call_operand.hbm [shape: bf16[128,128], index: 0, kind: input, shape index: {}]
  %s1 = inlined_call_operand.hbm [shape: f32[1,128], index: 1, kind: input, shape index: {}]
  %s2 = inlined_call_operand.hbm [shape: f32[1,128], index: 2, kind: input, shape index: {}]
  %s3 = inlined_call_operand.hbm [shape: bf16[128,128], index: 3, kind: output, shape index: {}]
  %s4 = sld [smem:[#allocation0]]
  $region34: #{resnet_block_forward.6} parent=0
    _
  %s6 = ssub.s32 1, %s4
  %s7 = scalar_select 0, %s6, %s4
  $region1: #{resnet_block_forward.6} parent=0
    #allocation2 [shape = 'u8[32768]{0}', space=vmem, size = 0x8000, scoped, tag = 'input window, operand 0, single buffered']
    #allocation3 [shape = 's32[1]{0}', space=sflag, size = 0x4, scoped, tag = 'scoped memory for resnet_block_forward.6']
    #allocation4 [shape = 's32[1]{0}', space=sflag, size = 0x4, scoped, tag = 'scoped memory for resnet_block_forward.6']
    #allocation5 [shape = 'u8[512]{0}', space=vmem, size = 0x400, scoped, tag = 'input window, operand 1, single buffered']
    #allocation6 [shape = 's32[1]{0}', space=sflag, size = 0x4, scoped, tag = 'scoped memory for resnet_block_forward.6']
    #allocation7 [shape = 'u8[512]{0}', space=vmem, size = 0x400, scoped, tag = 'input window, operand 2, single buffered']
    #allocation8 [shape = 'u8[32768]{0}', space=vmem, size = 0x8000, scoped, tag = 'output window, operand 0, single buffered']
    %8 = vsyncpa [#allocation3], 0
    %9 = vsyncpa [#allocation6], 0
    %10 = vsyncpa [#allocation4], 0
    // Predicated region
    $region2: #{resnet_block_forward.6} parent=1 // pred_check
      _
    $region3: #{resnet_block_forward.6} parent=1 // pred_check_branch
      %12 = sbr.rel (0) target = $region5
    $region4: #{resnet_block_forward.6} parent=1 // pred_region
      %s14 = ssub.s32 1024, 1024
      %15 = vsyncadd [#allocation3], %s14
      %s16 = sshll.u32 [#allocation2], 4
      %s17 = int_to_ptr.vmem [resolvable:$true] %s16
      %22 = dma.hbm_to_vmem [thread:$0]  %s0, 1024, %s17, [#allocation3], 64, 64, 4
    $region5: #{resnet_block_forward.6} parent=1 // pred_fallthru
      _
    // Predicated region
    $region6: #{resnet_block_forward.6} parent=1 // pred_check
      _
    $region7: #{resnet_block_forward.6} parent=1 // pred_check_branch
      %24 = sbr.rel (0) target = $region9
    $region8: #{resnet_block_forward.6} parent=1 // pred_region
      %s26 = ssub.s32 16, 16
      %27 = vsyncadd [#allocation6], %s26
      %s29 = sshll.u32 [#allocation5], 4
      %s30 = int_to_ptr.vmem [resolvable:$true] %s29
      %32 = dma.hbm_to_vmem [thread:$0]  %s1, 16, %s30, [#allocation6]
    $region9: #{resnet_block_forward.6} parent=1 // pred_fallthru
      _
    // Predicated region
    $region10: #{resnet_block_forward.6} parent=1 // pred_check
      _
    $region11: #{resnet_block_forward.6} parent=1 // pred_check_branch
      %34 = sbr.rel (0) target = $region13
    $region12: #{resnet_block_forward.6} parent=1 // pred_region
      %s36 = ssub.s32 16, 16
      %37 = vsyncadd [#allocation6], %s36
      %s39 = sshll.u32 [#allocation7], 4
      %s40 = int_to_ptr.vmem [resolvable:$true] %s39
      %42 = dma.hbm_to_vmem [thread:$0]  %s2, 16, %s40, [#allocation6]
    $region13: #{resnet_block_forward.6} parent=1 // pred_fallthru
      _
    // Predicated region
    $region14: #{resnet_block_forward.6} parent=1 // pred_check
      _
    $region15: #{resnet_block_forward.6} parent=1 // pred_check_branch
      %44 = sbr.rel (0) target = $region17
    $region16: #{resnet_block_forward.6} parent=1 // pred_region
      %45 = dma.done [#allocation3], 1024
    $region17: #{resnet_block_forward.6} parent=1 // pred_fallthru
      _
    // Predicated region
    $region18: #{resnet_block_forward.6} parent=1 // pred_check
      _
    $region19: #{resnet_block_forward.6} parent=1 // pred_check_branch
      %47 = sbr.rel (0) target = $region21
    $region20: #{resnet_block_forward.6} parent=1 // pred_region
      %48 = dma.done [#allocation6], 16
    $region21: #{resnet_block_forward.6} parent=1 // pred_fallthru
      _
    // Predicated region
    $region22: #{resnet_block_forward.6} parent=1 // pred_check
      _
    $region23: #{resnet_block_forward.6} parent=1 // pred_check_branch
      %50 = sbr.rel (0) target = $region25
    $region24: #{resnet_block_forward.6} parent=1 // pred_region
      %51 = dma.done [#allocation6], 16
    $region25: #{resnet_block_forward.6} parent=1 // pred_fallthru
      _
    %v52 = vld [vmem:[#allocation2] sm:$0xf]
    %v53 = vld [vmem:[#allocation2 + $0x4] sm:$0xf]
    %v54 = vld [vmem:[#allocation2 + $0x8] sm:$0xf]
    %v55 = vld [vmem:[#allocation2 + $0xc] sm:$0xf]
    %v56 = vld [vmem:[#allocation2 + $0x10] sm:$0xf]
    %v57 = vld [vmem:[#allocation2 + $0x14] sm:$0xf]
    %v58 = vld [vmem:[#allocation2 + $0x18] sm:$0xf]
    %v59 = vld [vmem:[#allocation2 + $0x1c] sm:$0xf]
    %v60 = vld [vmem:[#allocation2 + $0x20] sm:$0xf]
    %v61 = vld [vmem:[#allocation2 + $0x24] sm:$0xf]
    %v62 = vld [vmem:[#allocation2 + $0x28] sm:$0xf]
    %v63 = vld [vmem:[#allocation2 + $0x2c] sm:$0xf]
    %v64 = vld [vmem:[#allocation2 + $0x30] sm:$0xf]
    %v65 = vld [vmem:[#allocation2 + $0x34] sm:$0xf]
    %v66 = vld [vmem:[#allocation2 + $0x38] sm:$0xf]
    %v67 = vld [vmem:[#allocation2 + $0x3c] sm:$0xf]
    %v68 = vunpack.c.l.bf16 %v52
    %v69 = vunpack.c.l.bf16 %v53
    %v70 = vunpack.c.l.bf16 %v54
    %v71 = vunpack.c.l.bf16 %v55
    %v72 = vunpack.c.l.bf16 %v56
    %v73 = vunpack.c.l.bf16 %v57
    %v74 = vunpack.c.l.bf16 %v58
    %v75 = vunpack.c.l.bf16 %v59
    %v76 = vunpack.c.l.bf16 %v60
    %v77 = vunpack.c.l.bf16 %v61
    %v78 = vunpack.c.l.bf16 %v62
    %v79 = vunpack.c.l.bf16 %v63
    %v80 = vunpack.c.l.bf16 %v64
    %v81 = vunpack.c.l.bf16 %v65
    %v82 = vunpack.c.l.bf16 %v66
    %v83 = vunpack.c.l.bf16 %v67
    %v84 = vld [vmem:[#allocation5] sm:$0x1]
    %v86 = vlaneseq
    %v87 = vshrl.u32 %v86, 7
    %v88 = vsub.s32 0, %v87
    %v89 = vrot.slane %v84, %v88
    %v91 = vmul.f32 %v68, %v89
    %v92 = vmul.f32 %v69, %v89
    %v93 = vmul.f32 %v70, %v89
    %v94 = vmul.f32 %v71, %v89
    %v95 = vmul.f32 %v72, %v89
    %v96 = vmul.f32 %v73, %v89
    %v97 = vmul.f32 %v74, %v89
    %v98 = vmul.f32 %v75, %v89
    %v99 = vmul.f32 %v76, %v89
    %v100 = vmul.f32 %v77, %v89
    %v101 = vmul.f32 %v78, %v89
    %v102 = vmul.f32 %v79, %v89
    %v103 = vmul.f32 %v80, %v89
    %v104 = vmul.f32 %v81, %v89
    %v105 = vmul.f32 %v82, %v89
    %v106 = vmul.f32 %v83, %v89
    %v107 = vld [vmem:[#allocation7] sm:$0x1]
    %v109 = vlaneseq
    %v110 = vshrl.u32 %v109, 7
    %v111 = vsub.s32 0, %v110
    %v112 = vrot.slane %v107, %v111
    %v114 = vadd.f32 %v91, %v112
    %v115 = vadd.f32 %v92, %v112
    %v116 = vadd.f32 %v93, %v112
    %v117 = vadd.f32 %v94, %v112
    %v118 = vadd.f32 %v95, %v112
    %v119 = vadd.f32 %v96, %v112
    %v120 = vadd.f32 %v97, %v112
    %v121 = vadd.f32 %v98, %v112
    %v122 = vadd.f32 %v99, %v112
    %v123 = vadd.f32 %v100, %v112
    %v124 = vadd.f32 %v101, %v112
    %v125 = vadd.f32 %v102, %v112
    %v126 = vadd.f32 %v103, %v112
    %v127 = vadd.f32 %v104, %v112
    %v128 = vadd.f32 %v105, %v112
    %v129 = vadd.f32 %v106, %v112
    %v130 = vmax.f32 %v114, 0.0
    %v131 = vmax.f32 %v115, 0.0
    %v132 = vmax.f32 %v116, 0.0
    %v133 = vmax.f32 %v117, 0.0
    %v134 = vmax.f32 %v118, 0.0
    %v135 = vmax.f32 %v119, 0.0
    %v136 = vmax.f32 %v120, 0.0
    %v137 = vmax.f32 %v121, 0.0
    %v138 = vmax.f32 %v122, 0.0
    %v139 = vmax.f32 %v123, 0.0
    %v140 = vmax.f32 %v124, 0.0
    %v141 = vmax.f32 %v125, 0.0
    %v142 = vmax.f32 %v126, 0.0
    %v143 = vmax.f32 %v127, 0.0
    %v144 = vmax.f32 %v128, 0.0
    %v145 = vmax.f32 %v129, 0.0
    %v146 = vpack.c.bf16 %v131, %v130
    %v147 = vpack.c.bf16 %v133, %v132
    %v148 = vpack.c.bf16 %v135, %v134
    %v149 = vpack.c.bf16 %v137, %v136
    %v150 = vpack.c.bf16 %v139, %v138
    %v151 = vpack.c.bf16 %v141, %v140
    %v152 = vpack.c.bf16 %v143, %v142
    %v153 = vpack.c.bf16 %v145, %v144
    %v162 = vunpack.c.l.b16 %v146
    %v163 = vunpack.c.h.b16 %v146
    %v164 = vunpack.c.l.b16 %v147
    %v165 = vunpack.c.h.b16 %v147
    %v166 = vunpack.c.l.b16 %v148
    %v167 = vunpack.c.h.b16 %v148
    %v168 = vunpack.c.l.b16 %v149
    %v169 = vunpack.c.h.b16 %v149
    %v170 = vunpack.c.l.b16 %v150
    %v171 = vunpack.c.h.b16 %v150
    %v172 = vunpack.c.l.b16 %v151
    %v173 = vunpack.c.h.b16 %v151
    %v174 = vunpack.c.l.b16 %v152
    %v175 = vunpack.c.h.b16 %v152
    %v176 = vunpack.c.l.b16 %v153
    %v177 = vunpack.c.h.b16 %v153
    %v178 = vpack.c.b16 %v162, %v162
    %v179 = vpack.c.b16 %v163, %v163
    %v180 = vpack.c.b16 %v164, %v164
    %v181 = vpack.c.b16 %v165, %v165
    %v182 = vpack.c.b16 %v166, %v166
    %v183 = vpack.c.b16 %v167, %v167
    %v184 = vpack.c.b16 %v168, %v168
    %v185 = vpack.c.b16 %v169, %v169
    %v186 = vpack.c.b16 %v170, %v170
    %v187 = vpack.c.b16 %v171, %v171
    %v188 = vpack.c.b16 %v172, %v172
    %v189 = vpack.c.b16 %v173, %v173
    %v190 = vpack.c.b16 %v174, %v174
    %v191 = vpack.c.b16 %v175, %v175
    %v192 = vpack.c.b16 %v176, %v176
    %v193 = vpack.c.b16 %v177, %v177
    %210 = vst [vmem:[#allocation8] sm:$0xf] %v178
    %211 = vst [vmem:[#allocation8 + $0x4] sm:$0xf] %v179
    %212 = vst [vmem:[#allocation8 + $0x8] sm:$0xf] %v180
    %213 = vst [vmem:[#allocation8 + $0xc] sm:$0xf] %v181
    %214 = vst [vmem:[#allocation8 + $0x10] sm:$0xf] %v182
    %215 = vst [vmem:[#allocation8 + $0x14] sm:$0xf] %v183
    %216 = vst [vmem:[#allocation8 + $0x18] sm:$0xf] %v184
    %217 = vst [vmem:[#allocation8 + $0x1c] sm:$0xf] %v185
    %218 = vst [vmem:[#allocation8 + $0x20] sm:$0xf] %v186
    %219 = vst [vmem:[#allocation8 + $0x24] sm:$0xf] %v187
    %220 = vst [vmem:[#allocation8 + $0x28] sm:$0xf] %v188
    %221 = vst [vmem:[#allocation8 + $0x2c] sm:$0xf] %v189
    %222 = vst [vmem:[#allocation8 + $0x30] sm:$0xf] %v190
    %223 = vst [vmem:[#allocation8 + $0x34] sm:$0xf] %v191
    %224 = vst [vmem:[#allocation8 + $0x38] sm:$0xf] %v192
    %225 = vst [vmem:[#allocation8 + $0x3c] sm:$0xf] %v193
    // Predicated region
    $region26: #{resnet_block_forward.6} parent=1 // pred_check
      _
    $region27: #{resnet_block_forward.6} parent=1 // pred_check_branch
      %227 = sbr.rel (0) target = $region29
    $region28: #{resnet_block_forward.6} parent=1 // pred_region
      %s229 = ssub.s32 1024, 1024
      %230 = vsyncadd [#allocation4], %s229
      %s231 = sshll.u32 [#allocation8], 4
      %s232 = int_to_ptr.vmem [resolvable:$true] %s231
      %237 = dma.vmem_to_hbm [thread:$0]  %s232, 1024, %s3, [#allocation4], 64, 64, 4
    $region29: #{resnet_block_forward.6} parent=1 // pred_fallthru
      _
    // Predicated region
    $region30: #{resnet_block_forward.6} parent=1 // pred_check
      _
    $region31: #{resnet_block_forward.6} parent=1 // pred_check_branch
      %239 = sbr.rel (0) target = $region33
    $region32: #{resnet_block_forward.6} parent=1 // pred_region
      %240 = dma.done [#allocation4], 1024
    $region33: #{resnet_block_forward.6} parent=1 // pred_fallthru
      _
    %241 = vsyncpa [#allocation3], 1
    %242 = vsyncpa [#allocation6], 1
    %243 = vsyncpa [#allocation4], 1

// kernel: resnet_block_forward.5
$region0: #{resnet_block_forward.5}
  #allocation0 [shape = 'u32[]', space=smem, size = 0x4, offset = 0x4, fixed_abs, tag = 'smem constant byte address 0x4 - core index']
  #allocation1 [shape = 'u32[144,128]{1,0:T(1,128)}', space=vmem, size = 0x12000, scoped, tag = 'internal scratch']
  #allocation2 [shape = 'f32[128,128]{1,0:T(8,128)}', space=vmem, size = 0x10000, scoped, tag = 'scratch operand']
  %s0 = inlined_call_operand.hbm [shape: bf16[128,128], index: 0, kind: input, shape index: {}]
  %s1 = inlined_call_operand.hbm [shape: bf16[128,128], index: 1, kind: input, shape index: {}]
  %s2 = inlined_call_operand.hbm [shape: bf16[128,128], index: 2, kind: output, shape index: {0}]
  %s3 = inlined_call_operand.hbm [shape: f32[8,128], index: 3, kind: output, shape index: {1}]
  %s4 = inlined_call_operand.hbm [shape: f32[8,128], index: 4, kind: output, shape index: {2}]
  %5 = xla_tuple %s2, %s3, %s4
  %s6 = sld [smem:[#allocation0]]
  $region50: #{resnet_block_forward.5} parent=0
    _
  %s8 = ssub.s32 1, %s6
  %s9 = scalar_select 0, %s8, %s6
  $region1: #{resnet_block_forward.5} parent=0
    #allocation3 [shape = 'u8[32768]{0}', space=vmem, size = 0x8000, scoped, tag = 'input window, operand 0, single buffered']
    #allocation4 [shape = 's32[1]{0}', space=sflag, size = 0x4, scoped, tag = 'scoped memory for resnet_block_forward.5']
    #allocation5 [shape = 's32[1]{0}', space=sflag, size = 0x4, scoped, tag = 'scoped memory for resnet_block_forward.5']
    #allocation6 [shape = 'u8[32768]{0}', space=vmem, size = 0x8000, scoped, tag = 'input window, operand 1, single buffered']
    #allocation7 [shape = 's32[1]{0}', space=sflag, size = 0x4, scoped, tag = 'scoped memory for resnet_block_forward.5']
    #allocation8 [shape = 'u8[32768]{0}', space=vmem, size = 0x8000, scoped, tag = 'output window, operand 0, single buffered']
    #allocation9 [shape = 'u8[4096]{0}', space=vmem, size = 0x1000, scoped, tag = 'output window, operand 1, single buffered']
    #allocation10 [shape = 's32[1]{0}', space=sflag, size = 0x4, scoped, tag = 'scoped memory for resnet_block_forward.5']
    #allocation11 [shape = 'u8[4096]{0}', space=vmem, size = 0x1000, scoped, tag = 'output window, operand 2, single buffered']
    %10 = vsyncpa [#allocation4], 0
    %11 = vsyncpa [#allocation7], 0
    %12 = vsyncpa [#allocation5], 0
    %13 = vsyncpa [#allocation10], 0
    // Predicated region
    $region2: #{resnet_block_forward.5} parent=1 // pred_check
      _
    $region3: #{resnet_block_forward.5} parent=1 // pred_check_branch
      %15 = sbr.rel (0) target = $region5
    $region4: #{resnet_block_forward.5} parent=1 // pred_region
      %s17 = ssub.s32 1024, 1024
      %18 = vsyncadd [#allocation4], %s17
      %s19 = sshll.u32 [#allocation3], 4
      %s20 = int_to_ptr.vmem [resolvable:$true] %s19
      %25 = dma.hbm_to_vmem [thread:$0]  %s0, 1024, %s20, [#allocation4], 64, 64, 4
    $region5: #{resnet_block_forward.5} parent=1 // pred_fallthru
      _
    // Predicated region
    $region6: #{resnet_block_forward.5} parent=1 // pred_check
      _
    $region7: #{resnet_block_forward.5} parent=1 // pred_check_branch
      %27 = sbr.rel (0) target = $region9
    $region8: #{resnet_block_forward.5} parent=1 // pred_region
      %s29 = ssub.s32 1024, 1024
      %30 = vsyncadd [#allocation7], %s29
      %s31 = sshll.u32 [#allocation6], 4
      %s32 = int_to_ptr.vmem [resolvable:$true] %s31
      %37 = dma.hbm_to_vmem [thread:$0]  %s1, 1024, %s32, [#allocation7], 64, 64, 4
    $region9: #{resnet_block_forward.5} parent=1 // pred_fallthru
      _
    // Predicated region
    $region10: #{resnet_block_forward.5} parent=1 // pred_check
      _
    $region11: #{resnet_block_forward.5} parent=1 // pred_check_branch
      %39 = sbr.rel (0) target = $region13
    $region12: #{resnet_block_forward.5} parent=1 // pred_region
      %40 = dma.done [#allocation4], 1024
    $region13: #{resnet_block_forward.5} parent=1 // pred_fallthru
      _
    // Predicated region
    $region14: #{resnet_block_forward.5} parent=1 // pred_check
      _
    $region15: #{resnet_block_forward.5} parent=1 // pred_check_branch
      %42 = sbr.rel (0) target = $region17
    $region16: #{resnet_block_forward.5} parent=1 // pred_region
      %43 = dma.done [#allocation7], 1024
    $region17: #{resnet_block_forward.5} parent=1 // pred_fallthru
      _
    %p45 = scmp.eq.s32.totalorder 0, 0
    // Predicated region
    $region18: #{resnet_block_forward.5} parent=1 // pred_check
      %p46 = pneg %p45
    $region19: #{resnet_block_forward.5} parent=1 // pred_check_branch
      %48 = sbr.rel (%p46) target = $region21
    $region20: #{resnet_block_forward.5} parent=1 // pred_region
      %49 = vst [vmem:[#allocation2] sm:$0xff] 0.0
      %50 = vst [vmem:[#allocation2 + $0x8] sm:$0xff] 0.0
      %51 = vst [vmem:[#allocation2 + $0x10] sm:$0xff] 0.0
      %52 = vst [vmem:[#allocation2 + $0x18] sm:$0xff] 0.0
      %53 = vst [vmem:[#allocation2 + $0x20] sm:$0xff] 0.0
      %54 = vst [vmem:[#allocation2 + $0x28] sm:$0xff] 0.0
      %55 = vst [vmem:[#allocation2 + $0x30] sm:$0xff] 0.0
      %56 = vst [vmem:[#allocation2 + $0x38] sm:$0xff] 0.0
      %57 = vst [vmem:[#allocation2 + $0x40] sm:$0xff] 0.0
      %58 = vst [vmem:[#allocation2 + $0x48] sm:$0xff] 0.0
      %59 = vst [vmem:[#allocation2 + $0x50] sm:$0xff] 0.0
      %60 = vst [vmem:[#allocation2 + $0x58] sm:$0xff] 0.0
      %61 = vst [vmem:[#allocation2 + $0x60] sm:$0xff] 0.0
      %62 = vst [vmem:[#allocation2 + $0x68] sm:$0xff] 0.0
      %63 = vst [vmem:[#allocation2 + $0x70] sm:$0xff] 0.0
      %64 = vst [vmem:[#allocation2 + $0x78] sm:$0xff] 0.0
    $region21: #{resnet_block_forward.5} parent=1 // pred_fallthru
      _
    %v65 = vld [vmem:[#allocation2] sm:$0xff]
    %v66 = vld [vmem:[#allocation2 + $0x8] sm:$0xff]
    %v67 = vld [vmem:[#allocation2 + $0x10] sm:$0xff]
    %v68 = vld [vmem:[#allocation2 + $0x18] sm:$0xff]
    %v69 = vld [vmem:[#allocation2 + $0x20] sm:$0xff]
    %v70 = vld [vmem:[#allocation2 + $0x28] sm:$0xff]
    %v71 = vld [vmem:[#allocation2 + $0x30] sm:$0xff]
    %v72 = vld [vmem:[#allocation2 + $0x38] sm:$0xff]
    %v73 = vld [vmem:[#allocation2 + $0x40] sm:$0xff]
    %v74 = vld [vmem:[#allocation2 + $0x48] sm:$0xff]
    %v75 = vld [vmem:[#allocation2 + $0x50] sm:$0xff]
    %v76 = vld [vmem:[#allocation2 + $0x58] sm:$0xff]
    %v77 = vld [vmem:[#allocation2 + $0x60] sm:$0xff]
    %v78 = vld [vmem:[#allocation2 + $0x68] sm:$0xff]
    %v79 = vld [vmem:[#allocation2 + $0x70] sm:$0xff]
    %v80 = vld [vmem:[#allocation2 + $0x78] sm:$0xff]
    %v81 = vld [vmem:[#allocation3] sm:$0xf]
    %v82 = vld [vmem:[#allocation3 + $0x4] sm:$0xf]
    %v83 = vld [vmem:[#allocation3 + $0x8] sm:$0xf]
    %v84 = vld [vmem:[#allocation3 + $0xc] sm:$0xf]
    %v85 = vld [vmem:[#allocation3 + $0x10] sm:$0xf]
    %v86 = vld [vmem:[#allocation3 + $0x14] sm:$0xf]
    %v87 = vld [vmem:[#allocation3 + $0x18] sm:$0xf]
    %v88 = vld [vmem:[#allocation3 + $0x1c] sm:$0xf]
    %v89 = vld [vmem:[#allocation3 + $0x20] sm:$0xf]
    %v90 = vld [vmem:[#allocation3 + $0x24] sm:$0xf]
    %v91 = vld [vmem:[#allocation3 + $0x28] sm:$0xf]
    %v92 = vld [vmem:[#allocation3 + $0x2c] sm:$0xf]
    %v93 = vld [vmem:[#allocation3 + $0x30] sm:$0xf]
    %v94 = vld [vmem:[#allocation3 + $0x34] sm:$0xf]
    %v95 = vld [vmem:[#allocation3 + $0x38] sm:$0xf]
    %v96 = vld [vmem:[#allocation3 + $0x3c] sm:$0xf]
    %v97 = vld [vmem:[#allocation6] sm:$0xf]
    %v98 = vld [vmem:[#allocation6 + $0x4] sm:$0xf]
    %v99 = vld [vmem:[#allocation6 + $0x8] sm:$0xf]
    %v100 = vld [vmem:[#allocation6 + $0xc] sm:$0xf]
    %v101 = vld [vmem:[#allocation6 + $0x10] sm:$0xf]
    %v102 = vld [vmem:[#allocation6 + $0x14] sm:$0xf]
    %v103 = vld [vmem:[#allocation6 + $0x18] sm:$0xf]
    %v104 = vld [vmem:[#allocation6 + $0x1c] sm:$0xf]
    %v105 = vld [vmem:[#allocation6 + $0x20] sm:$0xf]
    %v106 = vld [vmem:[#allocation6 + $0x24] sm:$0xf]
    %v107 = vld [vmem:[#allocation6 + $0x28] sm:$0xf]
    %v108 = vld [vmem:[#allocation6 + $0x2c] sm:$0xf]
    %v109 = vld [vmem:[#allocation6 + $0x30] sm:$0xf]
    %v110 = vld [vmem:[#allocation6 + $0x34] sm:$0xf]
    %v111 = vld [vmem:[#allocation6 + $0x38] sm:$0xf]
    %v112 = vld [vmem:[#allocation6 + $0x3c] sm:$0xf]
    %v129 = vunpack.c.l.b16 %v81
    %v130 = vunpack.c.l.b16 %v82
    %v131 = vunpack.c.l.b16 %v83
    %v132 = vunpack.c.l.b16 %v84
    %v133 = vunpack.c.l.b16 %v85
    %v134 = vunpack.c.l.b16 %v86
    %v135 = vunpack.c.l.b16 %v87
    %v136 = vunpack.c.l.b16 %v88
    %v137 = vunpack.c.l.b16 %v89
    %v138 = vunpack.c.l.b16 %v90
    %v139 = vunpack.c.l.b16 %v91
    %v140 = vunpack.c.l.b16 %v92
    %v141 = vunpack.c.l.b16 %v93
    %v142 = vunpack.c.l.b16 %v94
    %v143 = vunpack.c.l.b16 %v95
    %v144 = vunpack.c.l.b16 %v96
    %v145 = vpack.c.b16 %v130, %v129
    %v146 = vpack.c.b16 %v132, %v131
    %v147 = vpack.c.b16 %v134, %v133
    %v148 = vpack.c.b16 %v136, %v135
    %v149 = vpack.c.b16 %v138, %v137
    %v150 = vpack.c.b16 %v140, %v139
    %v151 = vpack.c.b16 %v142, %v141
    %v152 = vpack.c.b16 %v144, %v143
    %v177 = vunpack.c.l.b16 %v97
    %v178 = vunpack.c.l.b16 %v98
    %v179 = vunpack.c.l.b16 %v99
    %v180 = vunpack.c.l.b16 %v100
    %v181 = vunpack.c.l.b16 %v101
    %v182 = vunpack.c.l.b16 %v102
    %v183 = vunpack.c.l.b16 %v103
    %v184 = vunpack.c.l.b16 %v104
    %v185 = vunpack.c.l.b16 %v105
    %v186 = vunpack.c.l.b16 %v106
    %v187 = vunpack.c.l.b16 %v107
    %v188 = vunpack.c.l.b16 %v108
    %v189 = vunpack.c.l.b16 %v109
    %v190 = vunpack.c.l.b16 %v110
    %v191 = vunpack.c.l.b16 %v111
    %v192 = vunpack.c.l.b16 %v112
    %v193 = vpack.c.b16 %v178, %v177
    %v194 = vpack.c.b16 %v180, %v179
    %v195 = vpack.c.b16 %v182, %v181
    %v196 = vpack.c.b16 %v184, %v183
    %v197 = vpack.c.b16 %v186, %v185
    %v198 = vpack.c.b16 %v188, %v187
    %v199 = vpack.c.b16 %v190, %v189
    %v200 = vpack.c.b16 %v192, %v191
    %209 = vmatprep.subr.bf16.mxu0 0
    %210 = vmatpush1.bf16.msra.mxu0 %v193
    %211 = vmatprep.subr.bf16.mxu0 0
    %212 = vmatpush1.bf16.msra.mxu0 %v194
    %213 = vmatprep.subr.bf16.mxu0 0
    %214 = vmatpush1.bf16.msra.mxu0 %v195
    %215 = vmatprep.subr.bf16.mxu0 0
    %216 = vmatpush1.bf16.msra.mxu0 %v196
    %217 = vmatprep.subr.bf16.mxu0 0
    %218 = vmatpush1.bf16.msra.mxu0 %v197
    %219 = vmatprep.subr.bf16.mxu0 0
    %220 = vmatpush1.bf16.msra.mxu0 %v198
    %221 = vmatprep.subr.bf16.mxu0 0
    %222 = vmatpush1.bf16.msra.mxu0 %v199
    %223 = vmatprep.subr.bf16.mxu0 0
    %224 = vmatpush1.bf16.msra.mxu0 %v200
    %225 = vmatprep.subr.bf16.mxu0 0
    %226 = vmatpush1.bf16.msra.mxu0 0
    %227 = vmatprep.subr.bf16.mxu0 0
    %228 = vmatpush1.bf16.msra.mxu0 0
    %229 = vmatprep.subr.bf16.mxu0 0
    %230 = vmatpush1.bf16.msra.mxu0 0
    %231 = vmatprep.subr.bf16.mxu0 0
    %232 = vmatpush1.bf16.msra.mxu0 0
    %233 = vmatprep.subr.bf16.mxu0 0
    %234 = vmatpush1.bf16.msra.mxu0 0
    %235 = vmatprep.subr.bf16.mxu0 0
    %236 = vmatpush1.bf16.msra.mxu0 0
    %237 = vmatprep.subr.bf16.mxu0 0
    %238 = vmatpush1.bf16.msra.mxu0 0
    %239 = vmatprep.subr.bf16.mxu0 0
    %240 = vmatpush1.bf16.msra.mxu0 0
    %241 = vmatprep.mubr.bf16.mxu0 0
    %242 = vmatmul.mubr.bf16.gmra.mrb[0].mxu0 %v145
    %v243 = vpop.f32.mrb[0].mxu0
    %v244 = vadd.f32 0.0, %v243
    %v245 = vpop.f32.mrb[0].mxu0
    %v246 = vpop.f32.mrb[0].mxu0
    %v247 = vadd.f32 0.0, %v246
    %v248 = vpop.f32.mrb[0].mxu0
    %249 = vmatprep.mubr.bf16.mxu0 0
    %250 = vmatmul.mubr.bf16.gmra.mrb[0].mxu0 %v146
    %v251 = vpop.f32.mrb[0].mxu0
    %v252 = vadd.f32 0.0, %v251
    %v253 = vpop.f32.mrb[0].mxu0
    %v254 = vpop.f32.mrb[0].mxu0
    %v255 = vadd.f32 0.0, %v254
    %v256 = vpop.f32.mrb[0].mxu0
    %257 = vmatprep.mubr.bf16.mxu0 0
    %258 = vmatmul.mubr.bf16.gmra.mrb[0].mxu0 %v147
    %v259 = vpop.f32.mrb[0].mxu0
    %v260 = vadd.f32 0.0, %v259
    %v261 = vpop.f32.mrb[0].mxu0
    %v262 = vpop.f32.mrb[0].mxu0
    %v263 = vadd.f32 0.0, %v262
    %v264 = vpop.f32.mrb[0].mxu0
    %265 = vmatprep.mubr.bf16.mxu0 0
    %266 = vmatmul.mubr.bf16.gmra.mrb[0].mxu0 %v148
    %v267 = vpop.f32.mrb[0].mxu0
    %v268 = vadd.f32 0.0, %v267
    %v269 = vpop.f32.mrb[0].mxu0
    %v270 = vpop.f32.mrb[0].mxu0
    %v271 = vadd.f32 0.0, %v270
    %v272 = vpop.f32.mrb[0].mxu0
    %273 = vmatprep.mubr.bf16.mxu0 0
    %274 = vmatmul.mubr.bf16.gmra.mrb[0].mxu0 %v149
    %v275 = vpop.f32.mrb[0].mxu0
    %v276 = vadd.f32 0.0, %v275
    %v277 = vpop.f32.mrb[0].mxu0
    %v278 = vpop.f32.mrb[0].mxu0
    %v279 = vadd.f32 0.0, %v278
    %v280 = vpop.f32.mrb[0].mxu0
    %281 = vmatprep.mubr.bf16.mxu0 0
    %282 = vmatmul.mubr.bf16.gmra.mrb[0].mxu0 %v150
    %v283 = vpop.f32.mrb[0].mxu0
    %v284 = vadd.f32 0.0, %v283
    %v285 = vpop.f32.mrb[0].mxu0
    %v286 = vpop.f32.mrb[0].mxu0
    %v287 = vadd.f32 0.0, %v286
    %v288 = vpop.f32.mrb[0].mxu0
    %289 = vmatprep.mubr.bf16.mxu0 0
    %290 = vmatmul.mubr.bf16.gmra.mrb[0].mxu0 %v151
    %v291 = vpop.f32.mrb[0].mxu0
    %v292 = vadd.f32 0.0, %v291
    %v293 = vpop.f32.mrb[0].mxu0
    %v294 = vpop.f32.mrb[0].mxu0
    %v295 = vadd.f32 0.0, %v294
    %v296 = vpop.f32.mrb[0].mxu0
    %297 = vmatprep.mubr.bf16.mxu0 0
    %298 = vmatmul.mubr.bf16.gmra.mrb[0].mxu0 %v152
    %v299 = vpop.f32.mrb[0].mxu0
    %v300 = vadd.f32 0.0, %v299
    %v301 = vpop.f32.mrb[0].mxu0
    %v302 = vpop.f32.mrb[0].mxu0
    %v303 = vadd.f32 0.0, %v302
    %v304 = vpop.f32.mrb[0].mxu0
    %305 = vdwg.mxu0
    %v306 = vadd.f32 %v65, %v244
    %v307 = vadd.f32 %v66, %v247
    %v308 = vadd.f32 %v67, %v252
    %v309 = vadd.f32 %v68, %v255
    %v310 = vadd.f32 %v69, %v260
    %v311 = vadd.f32 %v70, %v263
    %v312 = vadd.f32 %v71, %v268
    %v313 = vadd.f32 %v72, %v271
    %v314 = vadd.f32 %v73, %v276
    %v315 = vadd.f32 %v74, %v279
    %v316 = vadd.f32 %v75, %v284
    %v317 = vadd.f32 %v76, %v287
    %v318 = vadd.f32 %v77, %v292
    %v319 = vadd.f32 %v78, %v295
    %v320 = vadd.f32 %v79, %v300
    %v321 = vadd.f32 %v80, %v303
    %322 = vst [vmem:[#allocation2] sm:$0xff] %v306
    %323 = vst [vmem:[#allocation2 + $0x8] sm:$0xff] %v307
    %324 = vst [vmem:[#allocation2 + $0x10] sm:$0xff] %v308
    %325 = vst [vmem:[#allocation2 + $0x18] sm:$0xff] %v309
    %326 = vst [vmem:[#allocation2 + $0x20] sm:$0xff] %v310
    %327 = vst [vmem:[#allocation2 + $0x28] sm:$0xff] %v311
    %328 = vst [vmem:[#allocation2 + $0x30] sm:$0xff] %v312
    %329 = vst [vmem:[#allocation2 + $0x38] sm:$0xff] %v313
    %330 = vst [vmem:[#allocation2 + $0x40] sm:$0xff] %v314
    %331 = vst [vmem:[#allocation2 + $0x48] sm:$0xff] %v315
    %332 = vst [vmem:[#allocation2 + $0x50] sm:$0xff] %v316
    %333 = vst [vmem:[#allocation2 + $0x58] sm:$0xff] %v317
    %334 = vst [vmem:[#allocation2 + $0x60] sm:$0xff] %v318
    %335 = vst [vmem:[#allocation2 + $0x68] sm:$0xff] %v319
    %336 = vst [vmem:[#allocation2 + $0x70] sm:$0xff] %v320
    %337 = vst [vmem:[#allocation2 + $0x78] sm:$0xff] %v321
    // Predicated region
    $region22: #{resnet_block_forward.5} parent=1 // pred_check
      %p338 = pneg %p45
    $region23: #{resnet_block_forward.5} parent=1 // pred_check_branch
      %340 = sbr.rel (%p338) target = $region25
    $region24: #{resnet_block_forward.5} parent=1 // pred_region
      %v341 = vld [vmem:[#allocation2] sm:$0xff]
      %v342 = vld [vmem:[#allocation2 + $0x8] sm:$0xff]
      %v343 = vld [vmem:[#allocation2 + $0x10] sm:$0xff]
      %v344 = vld [vmem:[#allocation2 + $0x18] sm:$0xff]
      %v345 = vld [vmem:[#allocation2 + $0x20] sm:$0xff]
      %v346 = vld [vmem:[#allocation2 + $0x28] sm:$0xff]
      %v347 = vld [vmem:[#allocation2 + $0x30] sm:$0xff]
      %v348 = vld [vmem:[#allocation2 + $0x38] sm:$0xff]
      %v349 = vld [vmem:[#allocation2 + $0x40] sm:$0xff]
      %v350 = vld [vmem:[#allocation2 + $0x48] sm:$0xff]
      %v351 = vld [vmem:[#allocation2 + $0x50] sm:$0xff]
      %v352 = vld [vmem:[#allocation2 + $0x58] sm:$0xff]
      %v353 = vld [vmem:[#allocation2 + $0x60] sm:$0xff]
      %v354 = vld [vmem:[#allocation2 + $0x68] sm:$0xff]
      %v355 = vld [vmem:[#allocation2 + $0x70] sm:$0xff]
      %v356 = vld [vmem:[#allocation2 + $0x78] sm:$0xff]
      %v357 = vpack.c.bf16 %v342, %v341
      %v358 = vpack.c.bf16 %v344, %v343
      %v359 = vpack.c.bf16 %v346, %v345
      %v360 = vpack.c.bf16 %v348, %v347
      %v361 = vpack.c.bf16 %v350, %v349
      %v362 = vpack.c.bf16 %v352, %v351
      %v363 = vpack.c.bf16 %v354, %v353
      %v364 = vpack.c.bf16 %v356, %v355
      %v373 = vunpack.c.l.b16 %v357
      %v374 = vunpack.c.h.b16 %v357
      %v375 = vunpack.c.l.b16 %v358
      %v376 = vunpack.c.h.b16 %v358
      %v377 = vunpack.c.l.b16 %v359
      %v378 = vunpack.c.h.b16 %v359
      %v379 = vunpack.c.l.b16 %v360
      %v380 = vunpack.c.h.b16 %v360
      %v381 = vunpack.c.l.b16 %v361
      %v382 = vunpack.c.h.b16 %v361
      %v383 = vunpack.c.l.b16 %v362
      %v384 = vunpack.c.h.b16 %v362
      %v385 = vunpack.c.l.b16 %v363
      %v386 = vunpack.c.h.b16 %v363
      %v387 = vunpack.c.l.b16 %v364
      %v388 = vunpack.c.h.b16 %v364
      %v389 = vpack.c.b16 %v373, %v373
      %v390 = vpack.c.b16 %v374, %v374
      %v391 = vpack.c.b16 %v375, %v375
      %v392 = vpack.c.b16 %v376, %v376
      %v393 = vpack.c.b16 %v377, %v377
      %v394 = vpack.c.b16 %v378, %v378
      %v395 = vpack.c.b16 %v379, %v379
      %v396 = vpack.c.b16 %v380, %v380
      %v397 = vpack.c.b16 %v381, %v381
      %v398 = vpack.c.b16 %v382, %v382
      %v399 = vpack.c.b16 %v383, %v383
      %v400 = vpack.c.b16 %v384, %v384
      %v401 = vpack.c.b16 %v385, %v385
      %v402 = vpack.c.b16 %v386, %v386
      %v403 = vpack.c.b16 %v387, %v387
      %v404 = vpack.c.b16 %v388, %v388
      %421 = vst [vmem:[#allocation8] sm:$0xf] %v389
      %422 = vst [vmem:[#allocation8 + $0x4] sm:$0xf] %v390
      %423 = vst [vmem:[#allocation8 + $0x8] sm:$0xf] %v391
      %424 = vst [vmem:[#allocation8 + $0xc] sm:$0xf] %v392
      %425 = vst [vmem:[#allocation8 + $0x10] sm:$0xf] %v393
      %426 = vst [vmem:[#allocation8 + $0x14] sm:$0xf] %v394
      %427 = vst [vmem:[#allocation8 + $0x18] sm:$0xf] %v395
      %428 = vst [vmem:[#allocation8 + $0x1c] sm:$0xf] %v396
      %429 = vst [vmem:[#allocation8 + $0x20] sm:$0xf] %v397
      %430 = vst [vmem:[#allocation8 + $0x24] sm:$0xf] %v398
      %431 = vst [vmem:[#allocation8 + $0x28] sm:$0xf] %v399
      %432 = vst [vmem:[#allocation8 + $0x2c] sm:$0xf] %v400
      %433 = vst [vmem:[#allocation8 + $0x30] sm:$0xf] %v401
      %434 = vst [vmem:[#allocation8 + $0x34] sm:$0xf] %v402
      %435 = vst [vmem:[#allocation8 + $0x38] sm:$0xf] %v403
      %436 = vst [vmem:[#allocation8 + $0x3c] sm:$0xf] %v404
      %v437 = vadd.f32 %v341, %v342
      %v438 = vadd.f32 %v437, %v343
      %v439 = vadd.f32 %v438, %v344
      %v440 = vadd.f32 %v439, %v345
      %v441 = vadd.f32 %v440, %v346
      %v442 = vadd.f32 %v441, %v347
      %v443 = vadd.f32 %v442, %v348
      %v444 = vadd.f32 %v443, %v349
      %v445 = vadd.f32 %v444, %v350
      %v446 = vadd.f32 %v445, %v351
      %v447 = vadd.f32 %v446, %v352
      %v448 = vadd.f32 %v447, %v353
      %v449 = vadd.f32 %v448, %v354
      %v450 = vadd.f32 %v449, %v355
      %v451 = vadd.f32 %v450, %v356
      %v452 = vrot.slane %v451, 4
      %v453 = vadd.f32 %v451, %v452
      %v454 = vrot.slane %v453, 2
      %v455 = vadd.f32 %v453, %v454
      %v456 = vrot.slane %v455, 1
      %v457 = vadd.f32 %v455, %v456
      %v458 = vmul.f32 %v341, %v341
      %v459 = vmul.f32 %v342, %v342
      %v460 = vmul.f32 %v343, %v343
      %v461 = vmul.f32 %v344, %v344
      %v462 = vmul.f32 %v345, %v345
      %v463 = vmul.f32 %v346, %v346
      %v464 = vmul.f32 %v347, %v347
      %v465 = vmul.f32 %v348, %v348
      %v466 = vmul.f32 %v349, %v349
      %v467 = vmul.f32 %v350, %v350
      %v468 = vmul.f32 %v351, %v351
      %v469 = vmul.f32 %v352, %v352
      %v470 = vmul.f32 %v353, %v353
      %v471 = vmul.f32 %v354, %v354
      %v472 = vmul.f32 %v355, %v355
      %v473 = vmul.f32 %v356, %v356
      %v474 = vadd.f32 %v458, %v459
      %v475 = vadd.f32 %v474, %v460
      %v476 = vadd.f32 %v475, %v461
      %v477 = vadd.f32 %v476, %v462
      %v478 = vadd.f32 %v477, %v463
      %v479 = vadd.f32 %v478, %v464
      %v480 = vadd.f32 %v479, %v465
      %v481 = vadd.f32 %v480, %v466
      %v482 = vadd.f32 %v481, %v467
      %v483 = vadd.f32 %v482, %v468
      %v484 = vadd.f32 %v483, %v469
      %v485 = vadd.f32 %v484, %v470
      %v486 = vadd.f32 %v485, %v471
      %v487 = vadd.f32 %v486, %v472
      %v488 = vadd.f32 %v487, %v473
      %v489 = vrot.slane %v488, 4
      %v490 = vadd.f32 %v488, %v489
      %v491 = vrot.slane %v490, 2
      %v492 = vadd.f32 %v490, %v491
      %v493 = vrot.slane %v492, 1
      %v494 = vadd.f32 %v492, %v493
      %495 = vst [vmem:[#allocation9] sm:$0xff] %v457
      %496 = vst [vmem:[#allocation11] sm:$0xff] %v494
    $region25: #{resnet_block_forward.5} parent=1 // pred_fallthru
      _
    // Predicated region
    $region26: #{resnet_block_forward.5} parent=1 // pred_check
      _
    $region27: #{resnet_block_forward.5} parent=1 // pred_check_branch
      %498 = sbr.rel (0) target = $region29
    $region28: #{resnet_block_forward.5} parent=1 // pred_region
      %s500 = ssub.s32 1024, 1024
      %501 = vsyncadd [#allocation5], %s500
      %s502 = sshll.u32 [#allocation8], 4
      %s503 = int_to_ptr.vmem [resolvable:$true] %s502
      %508 = dma.vmem_to_hbm [thread:$0]  %s503, 1024, %s2, [#allocation5], 64, 64, 4
    $region29: #{resnet_block_forward.5} parent=1 // pred_fallthru
      _
    // Predicated region
    $region30: #{resnet_block_forward.5} parent=1 // pred_check
      _
    $region31: #{resnet_block_forward.5} parent=1 // pred_check_branch
      %510 = sbr.rel (0) target = $region33
    $region32: #{resnet_block_forward.5} parent=1 // pred_region
      %s512 = ssub.s32 128, 128
      %513 = vsyncadd [#allocation10], %s512
      %s515 = sshll.u32 [#allocation9], 4
      %s516 = int_to_ptr.vmem [resolvable:$true] %s515
      %518 = dma.vmem_to_hbm [thread:$0]  %s516, 128, %s3, [#allocation10]
    $region33: #{resnet_block_forward.5} parent=1 // pred_fallthru
      _
    // Predicated region
    $region34: #{resnet_block_forward.5} parent=1 // pred_check
      _
    $region35: #{resnet_block_forward.5} parent=1 // pred_check_branch
      %520 = sbr.rel (0) target = $region37
    $region36: #{resnet_block_forward.5} parent=1 // pred_region
      %s522 = ssub.s32 128, 128
      %523 = vsyncadd [#allocation10], %s522
      %s525 = sshll.u32 [#allocation11], 4
      %s526 = int_to_ptr.vmem [resolvable:$true] %s525
      %528 = dma.vmem_to_hbm [thread:$0]  %s526, 128, %s4, [#allocation10]
    $region37: #{resnet_block_forward.5} parent=1 // pred_fallthru
      _
    // Predicated region
    $region38: #{resnet_block_forward.5} parent=1 // pred_check
      _
    $region39: #{resnet_block_forward.5} parent=1 // pred_check_branch
      %530 = sbr.rel (0) target = $region41
    $region40: #{resnet_block_forward.5} parent=1 // pred_region
      %531 = dma.done [#allocation5], 1024
    $region41: #{resnet_block_forward.5} parent=1 // pred_fallthru
      _
    // Predicated region
    $region42: #{resnet_block_forward.5} parent=1 // pred_check
      _
    $region43: #{resnet_block_forward.5} parent=1 // pred_check_branch
      %533 = sbr.rel (0) target = $region45
    $region44: #{resnet_block_forward.5} parent=1 // pred_region
      %534 = dma.done [#allocation10], 128
    $region45: #{resnet_block_forward.5} parent=1 // pred_fallthru
      _
    // Predicated region
    $region46: #{resnet_block_forward.5} parent=1 // pred_check
      _
    $region47: #{resnet_block_forward.5} parent=1 // pred_check_branch
      %536 = sbr.rel (0) target = $region49
    $region48: #{resnet_block_forward.5} parent=1 // pred_region
      %537 = dma.done [#allocation10], 128
    $region49: #{resnet_block_forward.5} parent=1 // pred_fallthru
      _
    %538 = vsyncpa [#allocation4], 1
    %539 = vsyncpa [#allocation7], 1
    %540 = vsyncpa [#allocation5], 1
    %541 = vsyncpa [#allocation10], 1

// kernel: resnet_block_forward.9
$region0: #{resnet_block_forward.9}
  #allocation0 [shape = 'u32[]', space=smem, size = 0x4, offset = 0x4, fixed_abs, tag = 'smem constant byte address 0x4 - core index']
  #allocation1 [shape = 'u32[144,128]{1,0:T(1,128)}', space=vmem, size = 0x12000, scoped, tag = 'internal scratch']
  %s0 = inlined_call_operand.hbm [shape: bf16[128,128], index: 0, kind: input, shape index: {}]
  %s1 = inlined_call_operand.hbm [shape: f32[1,128], index: 1, kind: input, shape index: {}]
  %s2 = inlined_call_operand.hbm [shape: f32[1,128], index: 2, kind: input, shape index: {}]
  %s3 = inlined_call_operand.hbm [shape: bf16[128,128], index: 3, kind: input, shape index: {}]
  %s4 = inlined_call_operand.hbm [shape: f32[1,128], index: 4, kind: input, shape index: {}]
  %s5 = inlined_call_operand.hbm [shape: f32[1,128], index: 5, kind: input, shape index: {}]
  %s6 = inlined_call_operand.hbm [shape: f32[128,128], index: 6, kind: output, shape index: {}]
  %s7 = sld [smem:[#allocation0]]
  $region58: #{resnet_block_forward.9} parent=0
    _
  %s9 = ssub.s32 1, %s7
  %s10 = scalar_select 0, %s9, %s7
  $region1: #{resnet_block_forward.9} parent=0
    #allocation2 [shape = 'u8[32768]{0}', space=vmem, size = 0x8000, scoped, tag = 'input window, operand 0, single buffered']
    #allocation3 [shape = 's32[1]{0}', space=sflag, size = 0x4, scoped, tag = 'scoped memory for resnet_block_forward.9']
    #allocation4 [shape = 's32[1]{0}', space=sflag, size = 0x4, scoped, tag = 'scoped memory for resnet_block_forward.9']
    #allocation5 [shape = 'u8[512]{0}', space=vmem, size = 0x400, scoped, tag = 'input window, operand 1, single buffered']
    #allocation6 [shape = 's32[1]{0}', space=sflag, size = 0x4, scoped, tag = 'scoped memory for resnet_block_forward.9']
    #allocation7 [shape = 'u8[512]{0}', space=vmem, size = 0x400, scoped, tag = 'input window, operand 2, single buffered']
    #allocation8 [shape = 'u8[32768]{0}', space=vmem, size = 0x8000, scoped, tag = 'input window, operand 3, single buffered']
    #allocation9 [shape = 's32[1]{0}', space=sflag, size = 0x4, scoped, tag = 'scoped memory for resnet_block_forward.9']
    #allocation10 [shape = 'u8[512]{0}', space=vmem, size = 0x400, scoped, tag = 'input window, operand 4, single buffered']
    #allocation11 [shape = 'u8[512]{0}', space=vmem, size = 0x400, scoped, tag = 'input window, operand 5, single buffered']
    #allocation12 [shape = 's32[1]{0}', space=sflag, size = 0x4, scoped, tag = 'scoped memory for resnet_block_forward.9']
    #allocation13 [shape = 'u8[65536]{0}', space=vmem, size = 0x10000, scoped, tag = 'output window, operand 0, single buffered']
    %11 = vsyncpa [#allocation3], 0
    %12 = vsyncpa [#allocation6], 0
    %13 = vsyncpa [#allocation9], 0
    %14 = vsyncpa [#allocation12], 0
    %15 = vsyncpa [#allocation4], 0
    // Predicated region
    $region2: #{resnet_block_forward.9} parent=1 // pred_check
      _
    $region3: #{resnet_block_forward.9} parent=1 // pred_check_branch
      %17 = sbr.rel (0) target = $region5
    $region4: #{resnet_block_forward.9} parent=1 // pred_region
      %s19 = ssub.s32 1024, 1024
      %20 = vsyncadd [#allocation3], %s19
      %s21 = sshll.u32 [#allocation2], 4
      %s22 = int_to_ptr.vmem [resolvable:$true] %s21
      %27 = dma.hbm_to_vmem [thread:$0]  %s0, 1024, %s22, [#allocation3], 64, 64, 4
    $region5: #{resnet_block_forward.9} parent=1 // pred_fallthru
      _
    // Predicated region
    $region6: #{resnet_block_forward.9} parent=1 // pred_check
      _
    $region7: #{resnet_block_forward.9} parent=1 // pred_check_branch
      %29 = sbr.rel (0) target = $region9
    $region8: #{resnet_block_forward.9} parent=1 // pred_region
      %s31 = ssub.s32 16, 16
      %32 = vsyncadd [#allocation6], %s31
      %s34 = sshll.u32 [#allocation5], 4
      %s35 = int_to_ptr.vmem [resolvable:$true] %s34
      %37 = dma.hbm_to_vmem [thread:$0]  %s1, 16, %s35, [#allocation6]
    $region9: #{resnet_block_forward.9} parent=1 // pred_fallthru
      _
    // Predicated region
    $region10: #{resnet_block_forward.9} parent=1 // pred_check
      _
    $region11: #{resnet_block_forward.9} parent=1 // pred_check_branch
      %39 = sbr.rel (0) target = $region13
    $region12: #{resnet_block_forward.9} parent=1 // pred_region
      %s41 = ssub.s32 16, 16
      %42 = vsyncadd [#allocation6], %s41
      %s44 = sshll.u32 [#allocation7], 4
      %s45 = int_to_ptr.vmem [resolvable:$true] %s44
      %47 = dma.hbm_to_vmem [thread:$0]  %s2, 16, %s45, [#allocation6]
    $region13: #{resnet_block_forward.9} parent=1 // pred_fallthru
      _
    // Predicated region
    $region14: #{resnet_block_forward.9} parent=1 // pred_check
      _
    $region15: #{resnet_block_forward.9} parent=1 // pred_check_branch
      %49 = sbr.rel (0) target = $region17
    $region16: #{resnet_block_forward.9} parent=1 // pred_region
      %s51 = ssub.s32 1024, 1024
      %52 = vsyncadd [#allocation9], %s51
      %s53 = sshll.u32 [#allocation8], 4
      %s54 = int_to_ptr.vmem [resolvable:$true] %s53
      %59 = dma.hbm_to_vmem [thread:$0]  %s3, 1024, %s54, [#allocation9], 64, 64, 4
    $region17: #{resnet_block_forward.9} parent=1 // pred_fallthru
      _
    // Predicated region
    $region18: #{resnet_block_forward.9} parent=1 // pred_check
      _
    $region19: #{resnet_block_forward.9} parent=1 // pred_check_branch
      %61 = sbr.rel (0) target = $region21
    $region20: #{resnet_block_forward.9} parent=1 // pred_region
      %s63 = ssub.s32 16, 16
      %64 = vsyncadd [#allocation9], %s63
      %s66 = sshll.u32 [#allocation10], 4
      %s67 = int_to_ptr.vmem [resolvable:$true] %s66
      %69 = dma.hbm_to_vmem [thread:$0]  %s4, 16, %s67, [#allocation9]
    $region21: #{resnet_block_forward.9} parent=1 // pred_fallthru
      _
    // Predicated region
    $region22: #{resnet_block_forward.9} parent=1 // pred_check
      _
    $region23: #{resnet_block_forward.9} parent=1 // pred_check_branch
      %71 = sbr.rel (0) target = $region25
    $region24: #{resnet_block_forward.9} parent=1 // pred_region
      %s73 = ssub.s32 16, 16
      %74 = vsyncadd [#allocation12], %s73
      %s76 = sshll.u32 [#allocation11], 4
      %s77 = int_to_ptr.vmem [resolvable:$true] %s76
      %79 = dma.hbm_to_vmem [thread:$0]  %s5, 16, %s77, [#allocation12]
    $region25: #{resnet_block_forward.9} parent=1 // pred_fallthru
      _
    // Predicated region
    $region26: #{resnet_block_forward.9} parent=1 // pred_check
      _
    $region27: #{resnet_block_forward.9} parent=1 // pred_check_branch
      %81 = sbr.rel (0) target = $region29
    $region28: #{resnet_block_forward.9} parent=1 // pred_region
      %82 = dma.done [#allocation3], 1024
    $region29: #{resnet_block_forward.9} parent=1 // pred_fallthru
      _
    // Predicated region
    $region30: #{resnet_block_forward.9} parent=1 // pred_check
      _
    $region31: #{resnet_block_forward.9} parent=1 // pred_check_branch
      %84 = sbr.rel (0) target = $region33
    $region32: #{resnet_block_forward.9} parent=1 // pred_region
      %85 = dma.done [#allocation6], 16
    $region33: #{resnet_block_forward.9} parent=1 // pred_fallthru
      _
    // Predicated region
    $region34: #{resnet_block_forward.9} parent=1 // pred_check
      _
    $region35: #{resnet_block_forward.9} parent=1 // pred_check_branch
      %87 = sbr.rel (0) target = $region37
    $region36: #{resnet_block_forward.9} parent=1 // pred_region
      %88 = dma.done [#allocation6], 16
    $region37: #{resnet_block_forward.9} parent=1 // pred_fallthru
      _
    // Predicated region
    $region38: #{resnet_block_forward.9} parent=1 // pred_check
      _
    $region39: #{resnet_block_forward.9} parent=1 // pred_check_branch
      %90 = sbr.rel (0) target = $region41
    $region40: #{resnet_block_forward.9} parent=1 // pred_region
      %91 = dma.done [#allocation9], 1024
    $region41: #{resnet_block_forward.9} parent=1 // pred_fallthru
      _
    // Predicated region
    $region42: #{resnet_block_forward.9} parent=1 // pred_check
      _
    $region43: #{resnet_block_forward.9} parent=1 // pred_check_branch
      %93 = sbr.rel (0) target = $region45
    $region44: #{resnet_block_forward.9} parent=1 // pred_region
      %94 = dma.done [#allocation9], 16
    $region45: #{resnet_block_forward.9} parent=1 // pred_fallthru
      _
    // Predicated region
    $region46: #{resnet_block_forward.9} parent=1 // pred_check
      _
    $region47: #{resnet_block_forward.9} parent=1 // pred_check_branch
      %96 = sbr.rel (0) target = $region49
    $region48: #{resnet_block_forward.9} parent=1 // pred_region
      %97 = dma.done [#allocation12], 16
    $region49: #{resnet_block_forward.9} parent=1 // pred_fallthru
      _
    %v98 = vld [vmem:[#allocation2] sm:$0xf]
    %v99 = vld [vmem:[#allocation2 + $0x4] sm:$0xf]
    %v100 = vld [vmem:[#allocation2 + $0x8] sm:$0xf]
    %v101 = vld [vmem:[#allocation2 + $0xc] sm:$0xf]
    %v102 = vld [vmem:[#allocation2 + $0x10] sm:$0xf]
    %v103 = vld [vmem:[#allocation2 + $0x14] sm:$0xf]
    %v104 = vld [vmem:[#allocation2 + $0x18] sm:$0xf]
    %v105 = vld [vmem:[#allocation2 + $0x1c] sm:$0xf]
    %v106 = vld [vmem:[#allocation2 + $0x20] sm:$0xf]
    %v107 = vld [vmem:[#allocation2 + $0x24] sm:$0xf]
    %v108 = vld [vmem:[#allocation2 + $0x28] sm:$0xf]
    %v109 = vld [vmem:[#allocation2 + $0x2c] sm:$0xf]
    %v110 = vld [vmem:[#allocation2 + $0x30] sm:$0xf]
    %v111 = vld [vmem:[#allocation2 + $0x34] sm:$0xf]
    %v112 = vld [vmem:[#allocation2 + $0x38] sm:$0xf]
    %v113 = vld [vmem:[#allocation2 + $0x3c] sm:$0xf]
    %v114 = vunpack.c.l.bf16 %v98
    %v115 = vunpack.c.l.bf16 %v99
    %v116 = vunpack.c.l.bf16 %v100
    %v117 = vunpack.c.l.bf16 %v101
    %v118 = vunpack.c.l.bf16 %v102
    %v119 = vunpack.c.l.bf16 %v103
    %v120 = vunpack.c.l.bf16 %v104
    %v121 = vunpack.c.l.bf16 %v105
    %v122 = vunpack.c.l.bf16 %v106
    %v123 = vunpack.c.l.bf16 %v107
    %v124 = vunpack.c.l.bf16 %v108
    %v125 = vunpack.c.l.bf16 %v109
    %v126 = vunpack.c.l.bf16 %v110
    %v127 = vunpack.c.l.bf16 %v111
    %v128 = vunpack.c.l.bf16 %v112
    %v129 = vunpack.c.l.bf16 %v113
    %v130 = vld [vmem:[#allocation5] sm:$0x1]
    %v132 = vlaneseq
    %v133 = vshrl.u32 %v132, 7
    %v134 = vsub.s32 0, %v133
    %v135 = vrot.slane %v130, %v134
    %v137 = vmul.f32 %v114, %v135
    %v138 = vmul.f32 %v115, %v135
    %v139 = vmul.f32 %v116, %v135
    %v140 = vmul.f32 %v117, %v135
    %v141 = vmul.f32 %v118, %v135
    %v142 = vmul.f32 %v119, %v135
    %v143 = vmul.f32 %v120, %v135
    %v144 = vmul.f32 %v121, %v135
    %v145 = vmul.f32 %v122, %v135
    %v146 = vmul.f32 %v123, %v135
    %v147 = vmul.f32 %v124, %v135
    %v148 = vmul.f32 %v125, %v135
    %v149 = vmul.f32 %v126, %v135
    %v150 = vmul.f32 %v127, %v135
    %v151 = vmul.f32 %v128, %v135
    %v152 = vmul.f32 %v129, %v135
    %v153 = vld [vmem:[#allocation7] sm:$0x1]
    %v155 = vlaneseq
    %v156 = vshrl.u32 %v155, 7
    %v157 = vsub.s32 0, %v156
    %v158 = vrot.slane %v153, %v157
    %v160 = vadd.f32 %v137, %v158
    %v161 = vadd.f32 %v138, %v158
    %v162 = vadd.f32 %v139, %v158
    %v163 = vadd.f32 %v140, %v158
    %v164 = vadd.f32 %v141, %v158
    %v165 = vadd.f32 %v142, %v158
    %v166 = vadd.f32 %v143, %v158
    %v167 = vadd.f32 %v144, %v158
    %v168 = vadd.f32 %v145, %v158
    %v169 = vadd.f32 %v146, %v158
    %v170 = vadd.f32 %v147, %v158
    %v171 = vadd.f32 %v148, %v158
    %v172 = vadd.f32 %v149, %v158
    %v173 = vadd.f32 %v150, %v158
    %v174 = vadd.f32 %v151, %v158
    %v175 = vadd.f32 %v152, %v158
    %v176 = vld [vmem:[#allocation8] sm:$0xf]
    %v177 = vld [vmem:[#allocation8 + $0x4] sm:$0xf]
    %v178 = vld [vmem:[#allocation8 + $0x8] sm:$0xf]
    %v179 = vld [vmem:[#allocation8 + $0xc] sm:$0xf]
    %v180 = vld [vmem:[#allocation8 + $0x10] sm:$0xf]
    %v181 = vld [vmem:[#allocation8 + $0x14] sm:$0xf]
    %v182 = vld [vmem:[#allocation8 + $0x18] sm:$0xf]
    %v183 = vld [vmem:[#allocation8 + $0x1c] sm:$0xf]
    %v184 = vld [vmem:[#allocation8 + $0x20] sm:$0xf]
    %v185 = vld [vmem:[#allocation8 + $0x24] sm:$0xf]
    %v186 = vld [vmem:[#allocation8 + $0x28] sm:$0xf]
    %v187 = vld [vmem:[#allocation8 + $0x2c] sm:$0xf]
    %v188 = vld [vmem:[#allocation8 + $0x30] sm:$0xf]
    %v189 = vld [vmem:[#allocation8 + $0x34] sm:$0xf]
    %v190 = vld [vmem:[#allocation8 + $0x38] sm:$0xf]
    %v191 = vld [vmem:[#allocation8 + $0x3c] sm:$0xf]
    %v192 = vunpack.c.l.bf16 %v176
    %v193 = vunpack.c.l.bf16 %v177
    %v194 = vunpack.c.l.bf16 %v178
    %v195 = vunpack.c.l.bf16 %v179
    %v196 = vunpack.c.l.bf16 %v180
    %v197 = vunpack.c.l.bf16 %v181
    %v198 = vunpack.c.l.bf16 %v182
    %v199 = vunpack.c.l.bf16 %v183
    %v200 = vunpack.c.l.bf16 %v184
    %v201 = vunpack.c.l.bf16 %v185
    %v202 = vunpack.c.l.bf16 %v186
    %v203 = vunpack.c.l.bf16 %v187
    %v204 = vunpack.c.l.bf16 %v188
    %v205 = vunpack.c.l.bf16 %v189
    %v206 = vunpack.c.l.bf16 %v190
    %v207 = vunpack.c.l.bf16 %v191
    %v208 = vld [vmem:[#allocation10] sm:$0x1]
    %v210 = vlaneseq
    %v211 = vshrl.u32 %v210, 7
    %v212 = vsub.s32 0, %v211
    %v213 = vrot.slane %v208, %v212
    %v215 = vmul.f32 %v192, %v213
    %v216 = vmul.f32 %v193, %v213
    %v217 = vmul.f32 %v194, %v213
    %v218 = vmul.f32 %v195, %v213
    %v219 = vmul.f32 %v196, %v213
    %v220 = vmul.f32 %v197, %v213
    %v221 = vmul.f32 %v198, %v213
    %v222 = vmul.f32 %v199, %v213
    %v223 = vmul.f32 %v200, %v213
    %v224 = vmul.f32 %v201, %v213
    %v225 = vmul.f32 %v202, %v213
    %v226 = vmul.f32 %v203, %v213
    %v227 = vmul.f32 %v204, %v213
    %v228 = vmul.f32 %v205, %v213
    %v229 = vmul.f32 %v206, %v213
    %v230 = vmul.f32 %v207, %v213
    %v231 = vld [vmem:[#allocation11] sm:$0x1]
    %v233 = vlaneseq
    %v234 = vshrl.u32 %v233, 7
    %v235 = vsub.s32 0, %v234
    %v236 = vrot.slane %v231, %v235
    %v238 = vadd.f32 %v215, %v236
    %v239 = vadd.f32 %v216, %v236
    %v240 = vadd.f32 %v217, %v236
    %v241 = vadd.f32 %v218, %v236
    %v242 = vadd.f32 %v219, %v236
    %v243 = vadd.f32 %v220, %v236
    %v244 = vadd.f32 %v221, %v236
    %v245 = vadd.f32 %v222, %v236
    %v246 = vadd.f32 %v223, %v236
    %v247 = vadd.f32 %v224, %v236
    %v248 = vadd.f32 %v225, %v236
    %v249 = vadd.f32 %v226, %v236
    %v250 = vadd.f32 %v227, %v236
    %v251 = vadd.f32 %v228, %v236
    %v252 = vadd.f32 %v229, %v236
    %v253 = vadd.f32 %v230, %v236
    %v254 = vadd.f32 %v160, %v238
    %v255 = vadd.f32 %v161, %v239
    %v256 = vadd.f32 %v162, %v240
    %v257 = vadd.f32 %v163, %v241
    %v258 = vadd.f32 %v164, %v242
    %v259 = vadd.f32 %v165, %v243
    %v260 = vadd.f32 %v166, %v244
    %v261 = vadd.f32 %v167, %v245
    %v262 = vadd.f32 %v168, %v246
    %v263 = vadd.f32 %v169, %v247
    %v264 = vadd.f32 %v170, %v248
    %v265 = vadd.f32 %v171, %v249
    %v266 = vadd.f32 %v172, %v250
    %v267 = vadd.f32 %v173, %v251
    %v268 = vadd.f32 %v174, %v252
    %v269 = vadd.f32 %v175, %v253
    %v270 = vmax.f32 %v254, 0.0
    %v271 = vmax.f32 %v255, 0.0
    %v272 = vmax.f32 %v256, 0.0
    %v273 = vmax.f32 %v257, 0.0
    %v274 = vmax.f32 %v258, 0.0
    %v275 = vmax.f32 %v259, 0.0
    %v276 = vmax.f32 %v260, 0.0
    %v277 = vmax.f32 %v261, 0.0
    %v278 = vmax.f32 %v262, 0.0
    %v279 = vmax.f32 %v263, 0.0
    %v280 = vmax.f32 %v264, 0.0
    %v281 = vmax.f32 %v265, 0.0
    %v282 = vmax.f32 %v266, 0.0
    %v283 = vmax.f32 %v267, 0.0
    %v284 = vmax.f32 %v268, 0.0
    %v285 = vmax.f32 %v269, 0.0
    %286 = vst [vmem:[#allocation13] sm:$0xff] %v270
    %287 = vst [vmem:[#allocation13 + $0x8] sm:$0xff] %v271
    %288 = vst [vmem:[#allocation13 + $0x10] sm:$0xff] %v272
    %289 = vst [vmem:[#allocation13 + $0x18] sm:$0xff] %v273
    %290 = vst [vmem:[#allocation13 + $0x20] sm:$0xff] %v274
    %291 = vst [vmem:[#allocation13 + $0x28] sm:$0xff] %v275
    %292 = vst [vmem:[#allocation13 + $0x30] sm:$0xff] %v276
    %293 = vst [vmem:[#allocation13 + $0x38] sm:$0xff] %v277
    %294 = vst [vmem:[#allocation13 + $0x40] sm:$0xff] %v278
    %295 = vst [vmem:[#allocation13 + $0x48] sm:$0xff] %v279
    %296 = vst [vmem:[#allocation13 + $0x50] sm:$0xff] %v280
    %297 = vst [vmem:[#allocation13 + $0x58] sm:$0xff] %v281
    %298 = vst [vmem:[#allocation13 + $0x60] sm:$0xff] %v282
    %299 = vst [vmem:[#allocation13 + $0x68] sm:$0xff] %v283
    %300 = vst [vmem:[#allocation13 + $0x70] sm:$0xff] %v284
    %301 = vst [vmem:[#allocation13 + $0x78] sm:$0xff] %v285
    // Predicated region
    $region50: #{resnet_block_forward.9} parent=1 // pred_check
      _
    $region51: #{resnet_block_forward.9} parent=1 // pred_check_branch
      %303 = sbr.rel (0) target = $region53
    $region52: #{resnet_block_forward.9} parent=1 // pred_region
      %s305 = ssub.s32 2048, 2048
      %306 = vsyncadd [#allocation4], %s305
      %s307 = sshll.u32 [#allocation13], 4
      %s308 = int_to_ptr.vmem [resolvable:$true] %s307
      %313 = dma.vmem_to_hbm [thread:$0]  %s308, 2048, %s6, [#allocation4], 128, 128, 8
    $region53: #{resnet_block_forward.9} parent=1 // pred_fallthru
      _
    // Predicated region
    $region54: #{resnet_block_forward.9} parent=1 // pred_check
      _
    $region55: #{resnet_block_forward.9} parent=1 // pred_check_branch
      %315 = sbr.rel (0) target = $region57
    $region56: #{resnet_block_forward.9} parent=1 // pred_region
      %316 = dma.done [#allocation4], 2048
    $region57: #{resnet_block_forward.9} parent=1 // pred_fallthru
      _
    %317 = vsyncpa [#allocation3], 1
    %318 = vsyncpa [#allocation6], 1
    %319 = vsyncpa [#allocation9], 1
    %320 = vsyncpa [#allocation12], 1
    %321 = vsyncpa [#allocation4], 1

</llo_original>
